<compile_context>
chip_gen: v7x
topology: tpu7x:2x2x1
jax: 0.10.0
libtpu: 0.0.40
codegen_flags: <defaults>
</compile_context>

<pallas_src>
import jax
import jax.numpy as jnp
import numpy as np
from jax import lax
from jax.experimental import pallas as pl
from jax.experimental.pallas import tpu as pltpu

KERNEL_SIZES = (1, 3, 5)
KERNEL_NUMS = (30, 40, 50)
KMAX = max(KERNEL_SIZES)          # fused tap window = 5
MAX_PAD = KMAX // 2               # = 2
OC = sum(KERNEL_NUMS)             # = 120 real conv channels
OC_PAD = 128                      # lane-dense fused conv channel count
LANE = 128


def _round_up(x, m):
    return (x + m - 1) // m * m


def cnn_text_kernel(x_ref, slen_ref, wconv_ref, wfc_ref, bfc_ref, out_ref):
    # x_ref     : (B_TILE, L, E)          bf16 embedded tokens (batch tile)
    # slen_ref  : (B_TILE, 1)             int32 per-row sequence lengths
    # wconv_ref : (KMAX*E, OC_PAD)        bf16 fused, tap-aligned, zero-padded conv weight
    # wfc_ref   : (OC_PAD, C_PAD)         bf16 zero-padded FC weight
    # bfc_ref   : (1, C_PAD)              f32 zero-padded FC bias
    # out_ref   : (B_TILE, C_PAD)         f32 logits (lane-dense)
    b_tile, L, E = x_ref.shape
    oc = wconv_ref.shape[-1]
    M = b_tile * L

    x = x_ref[...]                                        # (b_tile, L, E) bf16

    # Value-level halo padding along L (compiler handles the sublane shifts on the
    # otherwise-idle XLU; no VMEM scratch, no per-step zero-fill, no misaligned stores).
    zpad = jnp.zeros((b_tile, MAX_PAD, E), x.dtype)
    xp = jnp.concatenate([zpad, x, zpad], axis=1)         # (b_tile, L + 2*MAX_PAD, E)

    # im2col: one (M, KMAX*E) activation -> a SINGLE K = KMAX*E MXU contraction.
    # Tap alignment (zero rows/cols in wconv) makes this exactly equal to the three
    # separate Conv1d's with pad = k // 2.
    taps = [xp[:, j:j + L, :].reshape(M, E) for j in range(KMAX)]
    im2col = jnp.concatenate(taps, axis=-1)               # (M, KMAX*E) bf16
    acc = jnp.dot(im2col, wconv_ref[...],
                  preferred_element_type=jnp.float32)     # (M, OC_PAD) f32

    y = jnp.maximum(acc, 0.0).reshape(b_tile, L, oc)      # ReLU

    # seq_len mask built in-kernel (applied after ReLU, before the max — same as ref).
    pos = lax.broadcasted_iota(jnp.int32, (b_tile, L, 1), 1)
    valid = pos < slen_ref[...].reshape(b_tile, 1, 1)
    y = jnp.where(valid, y, -1e30)                        # finite fill avoids -inf*0 NaN

    pooled = jnp.max(y, axis=1)                           # (b_tile, OC_PAD) f32

    # Single lane-dense FC matmul (bf16 operands, f32 accumulation) + f32 bias.
    out_ref[...] = (jnp.dot(pooled.astype(wfc_ref.dtype), wfc_ref[...],
                            preferred_element_type=jnp.float32) + bfc_ref[...])


def prepare_params(params):
    """Fuse / pad the PyTorch-layout parameters for the kernel (do once, not per call)."""
    E = params["embedding"].shape[1]
    # Fused conv weight: tap-aligned (conv with pad=k//2 uses fused taps
    # [MAX_PAD - k//2, MAX_PAD - k//2 + k)), channels concatenated in KERNEL_SIZES order,
    # zero padded to 128 lanes, then flattened tap-major to the im2col K layout.
    wconv = jnp.zeros((KMAX, E, OC_PAD), jnp.float32)
    off = 0
    for k, w in zip(KERNEL_SIZES, params["conv_w"]):       # w: (k, E, O_k)
        pad = k // 2
        o = w.shape[-1]
        wconv = wconv.at[MAX_PAD - pad:MAX_PAD - pad + k, :, off:off + o].set(w)
        off += o
    wconv = wconv.reshape(KMAX * E, OC_PAD)                # row j*E + e  <->  tap j, channel e

    wfc = params["fc_w"]                                   # (sum(O), C)
    C = wfc.shape[1]
    c_pad = _round_up(C, LANE)
    wfc_pad = jnp.zeros((OC_PAD, c_pad), jnp.float32).at[:off, :C].set(wfc)
    bfc_pad = jnp.zeros((1, c_pad), jnp.float32).at[:, :C].set(params["fc_b"])
    return {
        "embedding": params["embedding"].astype(jnp.bfloat16),
        "wconv": wconv.astype(jnp.bfloat16),
        "wfc": wfc_pad.astype(jnp.bfloat16),               # bf16 single-pass MXU matmul
        "bfc": bfc_pad,                                    # bias stays f32 (VPU add)
        "num_classes": C,
    }


def cnn_text_forward(words, seq_len, kparams, b_tile=256):
    """Pallas-backed CNNText forward (eval mode). Returns {'pred': [B, num_classes]}.

    b_tile: rows per grid step (M = b_tile * L).  Default 256 gives M=4096 for L=16;
    it is clamped down (to a multiple of 16) for small batches so tiny tests don't
    allocate huge padded tiles.  Working set at b_tile=256 is ~10 MiB; keep it under
    ~24 MiB (b_tile <= ~1024 at L=16/E=32) so it fits v7x's 64 MiB VMEM with
    double-buffering intact, and keep b_pad // b_tile >= 2 on v7x so both
    TensorCores get work.
    """
    emb = kparams["embedding"]                             # [V, E] bf16
    B, L = words.shape
    E = emb.shape[1]
    C = kparams["num_classes"]
    c_pad = kparams["wfc"].shape[1]

    # Batch tile must be a multiple of 16 ((8,128) sublane rule for the f32 out
    # block, 16 for bf16-friendly packing of the x tile).
    b_tile = _round_up(max(16, min(b_tile, _round_up(B, 16))), 16)
    assert b_tile % 16 == 0

    if seq_len is None:
        seq_len = jnp.full((B,), L, jnp.int32)

    # TODO(synk): fuse the embedding gather into the kernel (scalar-prefetched word
    # ids + per-row DMA) once the kernel is memory-bound; plain jnp.take glue for now.
    x = jnp.take(emb, words, axis=0)                       # [B, L, E] bf16

    b_pad = _round_up(B, b_tile)
    if b_pad != B:
        x = jnp.pad(x, ((0, b_pad - B), (0, 0), (0, 0)))
        seq_len = jnp.pad(seq_len, (0, b_pad - B), constant_values=1)
    slen = seq_len.astype(jnp.int32).reshape(b_pad, 1)

    wconv, wfc, bfc = kparams["wconv"], kparams["wfc"], kparams["bfc"]

    out = pl.pallas_call(
        cnn_text_kernel,
        out_shape=jax.ShapeDtypeStruct((b_pad, c_pad), jnp.float32),
        grid=(b_pad // b_tile,),
        in_specs=[
            pl.BlockSpec((b_tile, L, E), lambda b: (b, 0, 0)),   # batch tile of x
            pl.BlockSpec((b_tile, 1), lambda b: (b, 0)),         # per-row seq_len
            pl.BlockSpec(wconv.shape, lambda b: (0, 0)),         # fused im2col conv weight
            pl.BlockSpec(wfc.shape, lambda b: (0, 0)),           # padded FC weight
            pl.BlockSpec(bfc.shape, lambda b: (0, 0)),           # padded FC bias
        ],
        out_specs=pl.BlockSpec((b_tile, c_pad), lambda b: (b, 0)),
        compiler_params=pltpu.CompilerParams(
            dimension_semantics=("parallel",),                   # shards across TCs on v7x
            vmem_limit_bytes=48 * 1024 * 1024),                  # > v5e 16 MiB default, < v7x 64 MiB phys
    )(x, slen, wconv, wfc, bfc)

    # Dropout(p=0.5) is identity at inference (eval mode).
    # TODO(synk): training-mode dropout (random mask + 1/(1-p) scaling) not implemented.
    return {"pred": out[:B, :C]}


def reference_forward(words, seq_len, params):
    """Pure-JAX f32 reference mirroring the PyTorch NCL Conv1d path."""
    emb = params["embedding"]
    x = jnp.take(emb, words, axis=0).astype(jnp.float32)   # [B, L, E]
    x_ncl = jnp.transpose(x, (0, 2, 1))                    # [B, E, L]
    L = x.shape[1]
    mask = jnp.arange(L)[None, :] < seq_len[:, None]
    feats = []
    for k, w in zip(KERNEL_SIZES, params["conv_w"]):
        w_oik = jnp.transpose(w, (2, 1, 0))                # [O, E, k]  (PyTorch layout)
        y = lax.conv_general_dilated(x_ncl, w_oik, window_strides=(1,),
                                     padding=[(k // 2, k // 2)],
                                     dimension_numbers=("NCH", "OIH", "NCH"))
        y = jnp.maximum(y, 0.0)
        y = jnp.where(mask[:, None, :], y, -jnp.inf)
        feats.append(jnp.max(y, axis=-1))                  # [B, O]
    feat = jnp.concatenate(feats, axis=-1)                 # [B, sum(O)]
    return feat @ params["fc_w"] + params["fc_b"]          # [B, C]


if __name__ == "__main__":
    V, E, B, L, C = 50, 32, 2, 16, 5

    key = jax.random.PRNGKey(0)
    keys = jax.random.split(key, 8)

    params = {
        "embedding": jax.random.normal(keys[0], (V, E), jnp.float32) * 0.1,
        "conv_w": tuple(
            jax.random.normal(keys[1 + i], (k, E, o), jnp.float32) * 0.1
            for i, (k, o) in enumerate(zip(KERNEL_SIZES, KERNEL_NUMS))
        ),
        "fc_w": jax.random.normal(keys[4], (sum(KERNEL_NUMS), C), jnp.float32) * 0.1,
        "fc_b": jax.random.normal(keys[5], (1, C), jnp.float32) * 0.1,
    }

    words = jax.random.randint(keys[6], (B, L), 0, V, dtype=jnp.int32)
    seq_len = jnp.array([L, 9], dtype=jnp.int32)

    kparams = prepare_params(params)
    res = cnn_text_forward(words, seq_len, kparams)
    pred = jax.block_until_ready(res["pred"])

    ref = jax.block_until_ready(reference_forward(words, seq_len, params))
    np.testing.assert_allclose(np.asarray(pred, dtype=np.float32), np.asarray(ref),
                               rtol=2e-2, atol=2e-2)

    print("KERNEL_OK")
</pallas_src>

<mosaic_0001>
module attributes {stable_mosaic.version = 11 : i64} {
  func.func @cnn_text_kernel(%arg0: i32, %arg1: memref<16x16x32xbf16, #tpu.memory_space<vmem>>, %arg2: memref<16x1xi32, #tpu.memory_space<vmem>>, %arg3: memref<160x128xbf16, #tpu.memory_space<vmem>>, %arg4: memref<128x128xbf16, #tpu.memory_space<vmem>>, %arg5: memref<1x128xf32, #tpu.memory_space<vmem>>, %arg6: memref<16x128xf32, #tpu.memory_space<vmem>>) attributes {dimension_semantics = [#tpu.dimension_semantics<parallel>], iteration_bounds = array<i64: 1>, scalar_prefetch = 0 : i64, scratch_operands = 0 : i64, tpu.core_type = #tpu.core_type<tc>, window_params = [{transform_indices = @transform_0, window_bounds = array<i64: 16, 16, 32>}, {transform_indices = @transform_1, window_bounds = array<i64: 16, 1>}, {pipeline_mode = #tpu.pipeline_mode<synchronous>, transform_indices = @transform_2, window_bounds = array<i64: 160, 128>}, {pipeline_mode = #tpu.pipeline_mode<synchronous>, transform_indices = @transform_3, window_bounds = array<i64: 128, 128>}, {pipeline_mode = #tpu.pipeline_mode<synchronous>, transform_indices = @transform_4, window_bounds = array<i64: 1, 128>}, {transform_indices = @transform_5, window_bounds = array<i64: 16, 128>}]} {
    %c0 = arith.constant 0 : index
    %c0_0 = arith.constant 0 : index
    %c0_1 = arith.constant 0 : index
    %0 = vector.load %arg1[%c0, %c0_0, %c0_1] : memref<16x16x32xbf16, #tpu.memory_space<vmem>>, vector<16x16x32xbf16>
    %cst = arith.constant 0.000000e+00 : bf16
    %1 = vector.broadcast %cst : bf16 to vector<16x2x32xbf16>
    %2 = tpu.concatenate %1, %0, %1 in 1 : vector<16x2x32xbf16>, vector<16x16x32xbf16>, vector<16x2x32xbf16> -> vector<16x20x32xbf16>
    %3 = vector.extract_strided_slice %2 {offsets = [0, 0, 0], sizes = [16, 16, 32], strides = [1, 1, 1]} : vector<16x20x32xbf16> to vector<16x16x32xbf16>
    %4 = vector.shape_cast %3 : vector<16x16x32xbf16> to vector<256x32xbf16>
    %5 = vector.extract_strided_slice %2 {offsets = [0, 1, 0], sizes = [16, 16, 32], strides = [1, 1, 1]} : vector<16x20x32xbf16> to vector<16x16x32xbf16>
    %6 = vector.shape_cast %5 : vector<16x16x32xbf16> to vector<256x32xbf16>
    %7 = vector.extract_strided_slice %2 {offsets = [0, 2, 0], sizes = [16, 16, 32], strides = [1, 1, 1]} : vector<16x20x32xbf16> to vector<16x16x32xbf16>
    %8 = vector.shape_cast %7 : vector<16x16x32xbf16> to vector<256x32xbf16>
    %9 = vector.extract_strided_slice %2 {offsets = [0, 3, 0], sizes = [16, 16, 32], strides = [1, 1, 1]} : vector<16x20x32xbf16> to vector<16x16x32xbf16>
    %10 = vector.shape_cast %9 : vector<16x16x32xbf16> to vector<256x32xbf16>
    %11 = vector.extract_strided_slice %2 {offsets = [0, 4, 0], sizes = [16, 16, 32], strides = [1, 1, 1]} : vector<16x20x32xbf16> to vector<16x16x32xbf16>
    %12 = vector.shape_cast %11 : vector<16x16x32xbf16> to vector<256x32xbf16>
    %13 = tpu.concatenate %4, %6, %8, %10, %12 in 1 : vector<256x32xbf16>, vector<256x32xbf16>, vector<256x32xbf16>, vector<256x32xbf16>, vector<256x32xbf16> -> vector<256x160xbf16>
    %c0_2 = arith.constant 0 : index
    %c0_3 = arith.constant 0 : index
    %14 = vector.load %arg3[%c0_2, %c0_3] : memref<160x128xbf16, #tpu.memory_space<vmem>>, vector<160x128xbf16>
    %cst_4 = arith.constant dense<0.000000e+00> : vector<256x128xf32>
    %15 = tpu.matmul %13, %14, %cst_4 {dimension_numbers = #tpu.dot_dimension_numbers<[1], [0], [0], [1], [0, 0, 1, 1], [], []>} : vector<256x160xbf16>, vector<160x128xbf16>, vector<256x128xf32> -> vector<256x128xf32>
    %cst_5 = arith.constant 0.000000e+00 : f32
    %16 = vector.broadcast %cst_5 : f32 to vector<256x128xf32>
    %17 = arith.maximumf %15, %16 : vector<256x128xf32>
    %18 = vector.shape_cast %17 : vector<256x128xf32> to vector<16x16x128xf32>
    %19 = tpu.iota {dimensions = array<i32: 1>} : vector<16x16x1xi32>
    %c0_6 = arith.constant 0 : index
    %c0_7 = arith.constant 0 : index
    %20 = vector.load %arg2[%c0_6, %c0_7] : memref<16x1xi32, #tpu.memory_space<vmem>>, vector<16x1xi32>
    %21 = vector.shape_cast %20 : vector<16x1xi32> to vector<16x1x1xi32>
    %22 = vector.broadcast %21 : vector<16x1x1xi32> to vector<16x16x1xi32>
    %23 = arith.cmpi slt, %19, %22 : vector<16x16x1xi32>
    %cst_8 = arith.constant -1.000000e+30 : f32
    %24 = vector.shape_cast %23 : vector<16x16x1xi1> to vector<16x16x1xi1>
    %25 = vector.broadcast %24 : vector<16x16x1xi1> to vector<16x16x128xi1>
    %26 = vector.broadcast %cst_8 : f32 to vector<16x16x128xf32>
    %27 = arith.select %25, %18, %26 : vector<16x16x128xi1>, vector<16x16x128xf32>
    %cst_9 = arith.constant dense<0xFF800000> : vector<16x128xf32>
    %28 = vector.multi_reduction <maximumf>, %27, %cst_9 [1] : vector<16x16x128xf32> to vector<16x128xf32>
    %29 = arith.truncf %28 : vector<16x128xf32> to vector<16x128xbf16>
    %c0_10 = arith.constant 0 : index
    %c0_11 = arith.constant 0 : index
    %30 = vector.load %arg4[%c0_10, %c0_11] : memref<128x128xbf16, #tpu.memory_space<vmem>>, vector<128x128xbf16>
    %cst_12 = arith.constant dense<0.000000e+00> : vector<16x128xf32>
    %31 = tpu.matmul %29, %30, %cst_12 {dimension_numbers = #tpu.dot_dimension_numbers<[1], [0], [0], [1], [0, 0, 1, 1], [], []>} : vector<16x128xbf16>, vector<128x128xbf16>, vector<16x128xf32> -> vector<16x128xf32>
    %c0_13 = arith.constant 0 : index
    %c0_14 = arith.constant 0 : index
    %32 = vector.load %arg5[%c0_13, %c0_14] : memref<1x128xf32, #tpu.memory_space<vmem>>, vector<1x128xf32>
    %33 = vector.broadcast %32 : vector<1x128xf32> to vector<16x128xf32>
    %34 = arith.addf %31, %33 : vector<16x128xf32>
    %c0_15 = arith.constant 0 : index
    %c0_16 = arith.constant 0 : index
    %35 = vector.load %arg6[%c0_15, %c0_16] : memref<16x128xf32, #tpu.memory_space<vmem>>, vector<16x128xf32>
    tpu.vector_store %arg6[%c0_15, %c0_16], %34 {strides = array<i32>} : memref<16x128xf32, #tpu.memory_space<vmem>>, vector<16x128xf32>,
    return
  }
  func.func @transform_0(%arg0: i32) -> (i32, i32, i32) {
    %c0_i32 = arith.constant 0 : i32
    %c0_i32_0 = arith.constant 0 : i32
    %c0_i32_1 = arith.constant 0 : i32
    return %arg0, %c0_i32, %c0_i32_0 : i32, i32, i32
  }
  func.func @transform_1(%arg0: i32) -> (i32, i32) {
    %c0_i32 = arith.constant 0 : i32
    %c0_i32_0 = arith.constant 0 : i32
    return %arg0, %c0_i32 : i32, i32
  }
  func.func @transform_2(%arg0: i32) -> (i32, i32) {
    %c0_i32 = arith.constant 0 : i32
    %c0_i32_0 = arith.constant 0 : i32
    %c0_i32_1 = arith.constant 0 : i32
    return %c0_i32, %c0_i32_0 : i32, i32
  }
  func.func @transform_3(%arg0: i32) -> (i32, i32) {
    %c0_i32 = arith.constant 0 : i32
    %c0_i32_0 = arith.constant 0 : i32
    %c0_i32_1 = arith.constant 0 : i32
    return %c0_i32, %c0_i32_0 : i32, i32
  }
  func.func @transform_4(%arg0: i32) -> (i32, i32) {
    %c0_i32 = arith.constant 0 : i32
    %c0_i32_0 = arith.constant 0 : i32
    %c0_i32_1 = arith.constant 0 : i32
    return %c0_i32, %c0_i32_0 : i32, i32
  }
  func.func @transform_5(%arg0: i32) -> (i32, i32) {
    %c0_i32 = arith.constant 0 : i32
    %c0_i32_0 = arith.constant 0 : i32
    return %arg0, %c0_i32 : i32, i32
  }
}

</mosaic_0001>

<llo_original>
// kernel: tpu_custom_call.1
$region0: #{tpu_custom_call.1}
  #allocation0 [shape = 'u32[]', space=smem, size = 0x4, offset = 0x4, fixed_abs, tag = 'smem constant byte address 0x4 - core index']
  #allocation1 [shape = 'u32[144,128]{1,0:T(1,128)}', space=vmem, size = 0x12000, scoped, tag = 'internal scratch']
  %s0 = inlined_call_operand.hbm [shape: bf16[16,16,32], index: 0, kind: input, shape index: {}]
  %s1 = inlined_call_operand.vmem [shape: s32[16,1], index: 1, kind: input, shape index: {}]
  %s2 = inlined_call_operand.hbm [shape: bf16[160,128], index: 2, kind: input, shape index: {}]
  %s3 = inlined_call_operand.hbm [shape: bf16[128,128], index: 3, kind: input, shape index: {}]
  %s4 = inlined_call_operand.vmem [shape: f32[1,128], index: 4, kind: input, shape index: {}]
  %s5 = inlined_call_operand.hbm [shape: f32[16,128], index: 5, kind: output, shape index: {}]
  %s6 = sld [smem:[#allocation0]]
  $region42: #{tpu_custom_call.1} parent=0
    _
  %s8 = ssub.s32 1, %s6
  %s9 = scalar_select 0, %s8, %s6
  $region1: #{tpu_custom_call.1} parent=0
    #allocation2 [shape = 'u8[65536]{0}', space=vmem, size = 0x10000, scoped, tag = 'input window, operand 0, single buffered']
    #allocation3 [shape = 's32[1]{0}', space=sflag, size = 0x4, scoped, tag = 'scoped memory for tpu_custom_call.1']
    #allocation4 [shape = 's32[1]{0}', space=sflag, size = 0x4, scoped, tag = 'scoped memory for tpu_custom_call.1']
    #allocation5 [shape = 'u8[40960]{0}', space=vmem, size = 0xa000, scoped, tag = 'input window, operand 2, single buffered']
    #allocation6 [shape = 's32[1]{0}', space=sflag, size = 0x4, scoped, tag = 'scoped memory for tpu_custom_call.1']
    #allocation7 [shape = 'u8[32768]{0}', space=vmem, size = 0x8000, scoped, tag = 'input window, operand 3, single buffered']
    #allocation8 [shape = 'u8[8192]{0}', space=vmem, size = 0x2000, scoped, tag = 'output window, operand 0, single buffered']
    %10 = vsyncpa [#allocation3], 0
    %11 = vsyncpa [#allocation6], 0
    %12 = vsyncpa [#allocation4], 0
    // Predicated region
    $region2: #{tpu_custom_call.1} parent=1 // pred_check
      _
    $region3: #{tpu_custom_call.1} parent=1 // pred_check_branch
      %14 = sbr.rel (0) target = $region5
    $region4: #{tpu_custom_call.1} parent=1 // pred_region
      %s16 = ssub.s32 2048, 2048
      %17 = vsyncadd [#allocation3], %s16
      %s18 = sshll.u32 [#allocation2], 4
      %s19 = int_to_ptr.vmem [resolvable:$true] %s18
      %24 = dma.hbm_to_vmem [thread:$0]  %s0, 2048, %s19, [#allocation3], 64, 64, 4
    $region5: #{tpu_custom_call.1} parent=1 // pred_fallthru
      _
    // Predicated region
    $region6: #{tpu_custom_call.1} parent=1 // pred_check
      _
    $region7: #{tpu_custom_call.1} parent=1 // pred_check_branch
      %26 = sbr.rel (0) target = $region9
    $region8: #{tpu_custom_call.1} parent=1 // pred_region
      _
    $region9: #{tpu_custom_call.1} parent=1 // pred_fallthru
      _
    // Predicated region
    $region10: #{tpu_custom_call.1} parent=1 // pred_check
      _
    $region11: #{tpu_custom_call.1} parent=1 // pred_check_branch
      %28 = sbr.rel (0) target = $region13
    $region12: #{tpu_custom_call.1} parent=1 // pred_region
      %s30 = ssub.s32 1280, 1280
      %31 = vsyncadd [#allocation6], %s30
      %s32 = sshll.u32 [#allocation5], 4
      %s33 = int_to_ptr.vmem [resolvable:$true] %s32
      %38 = dma.hbm_to_vmem [thread:$0]  %s2, 1280, %s33, [#allocation6], 64, 64, 4
    $region13: #{tpu_custom_call.1} parent=1 // pred_fallthru
      _
    // Predicated region
    $region14: #{tpu_custom_call.1} parent=1 // pred_check
      _
    $region15: #{tpu_custom_call.1} parent=1 // pred_check_branch
      %40 = sbr.rel (0) target = $region17
    $region16: #{tpu_custom_call.1} parent=1 // pred_region
      %s42 = ssub.s32 1024, 1024
      %43 = vsyncadd [#allocation6], %s42
      %s44 = sshll.u32 [#allocation7], 4
      %s45 = int_to_ptr.vmem [resolvable:$true] %s44
      %50 = dma.hbm_to_vmem [thread:$0]  %s3, 1024, %s45, [#allocation6], 64, 64, 4
    $region17: #{tpu_custom_call.1} parent=1 // pred_fallthru
      _
    // Predicated region
    $region18: #{tpu_custom_call.1} parent=1 // pred_check
      _
    $region19: #{tpu_custom_call.1} parent=1 // pred_check_branch
      %52 = sbr.rel (0) target = $region21
    $region20: #{tpu_custom_call.1} parent=1 // pred_region
      _
    $region21: #{tpu_custom_call.1} parent=1 // pred_fallthru
      _
    // Predicated region
    $region22: #{tpu_custom_call.1} parent=1 // pred_check
      _
    $region23: #{tpu_custom_call.1} parent=1 // pred_check_branch
      %54 = sbr.rel (0) target = $region25
    $region24: #{tpu_custom_call.1} parent=1 // pred_region
      %55 = dma.done [#allocation3], 2048
    $region25: #{tpu_custom_call.1} parent=1 // pred_fallthru
      _
    // Predicated region
    $region26: #{tpu_custom_call.1} parent=1 // pred_check
      _
    $region27: #{tpu_custom_call.1} parent=1 // pred_check_branch
      %57 = sbr.rel (0) target = $region29
    $region28: #{tpu_custom_call.1} parent=1 // pred_region
      %58 = dma.done [#allocation6], 1280
    $region29: #{tpu_custom_call.1} parent=1 // pred_fallthru
      _
    // Predicated region
    $region30: #{tpu_custom_call.1} parent=1 // pred_check
      _
    $region31: #{tpu_custom_call.1} parent=1 // pred_check_branch
      %60 = sbr.rel (0) target = $region33
    $region32: #{tpu_custom_call.1} parent=1 // pred_region
      %61 = dma.done [#allocation6], 1024
    $region33: #{tpu_custom_call.1} parent=1 // pred_fallthru
      _
    %v63 = vld [vmem:[#allocation2] sm:$0xf]
    %v64 = vld [vmem:[#allocation2 + $0x4] sm:$0xf]
    %v65 = vld [vmem:[#allocation2 + $0x8] sm:$0xf]
    %v66 = vld [vmem:[#allocation2 + $0xc] sm:$0xf]
    %v67 = vld [vmem:[#allocation2 + $0x10] sm:$0xf]
    %v68 = vld [vmem:[#allocation2 + $0x14] sm:$0xf]
    %v69 = vld [vmem:[#allocation2 + $0x18] sm:$0xf]
    %v70 = vld [vmem:[#allocation2 + $0x1c] sm:$0xf]
    %v71 = vld [vmem:[#allocation2 + $0x20] sm:$0xf]
    %v72 = vld [vmem:[#allocation2 + $0x24] sm:$0xf]
    %v73 = vld [vmem:[#allocation2 + $0x28] sm:$0xf]
    %v74 = vld [vmem:[#allocation2 + $0x2c] sm:$0xf]
    %v75 = vld [vmem:[#allocation2 + $0x30] sm:$0xf]
    %v76 = vld [vmem:[#allocation2 + $0x34] sm:$0xf]
    %v77 = vld [vmem:[#allocation2 + $0x38] sm:$0xf]
    %v78 = vld [vmem:[#allocation2 + $0x3c] sm:$0xf]
    %v79 = vld [vmem:[#allocation2 + $0x40] sm:$0xf]
    %v80 = vld [vmem:[#allocation2 + $0x44] sm:$0xf]
    %v81 = vld [vmem:[#allocation2 + $0x48] sm:$0xf]
    %v82 = vld [vmem:[#allocation2 + $0x4c] sm:$0xf]
    %v83 = vld [vmem:[#allocation2 + $0x50] sm:$0xf]
    %v84 = vld [vmem:[#allocation2 + $0x54] sm:$0xf]
    %v85 = vld [vmem:[#allocation2 + $0x58] sm:$0xf]
    %v86 = vld [vmem:[#allocation2 + $0x5c] sm:$0xf]
    %v87 = vld [vmem:[#allocation2 + $0x60] sm:$0xf]
    %v88 = vld [vmem:[#allocation2 + $0x64] sm:$0xf]
    %v89 = vld [vmem:[#allocation2 + $0x68] sm:$0xf]
    %v90 = vld [vmem:[#allocation2 + $0x6c] sm:$0xf]
    %v91 = vld [vmem:[#allocation2 + $0x70] sm:$0xf]
    %v92 = vld [vmem:[#allocation2 + $0x74] sm:$0xf]
    %v93 = vld [vmem:[#allocation2 + $0x78] sm:$0xf]
    %v94 = vld [vmem:[#allocation2 + $0x7c] sm:$0xf]
    %v127 = vunpack.c.l.b16 %v63
    %v128 = vunpack.c.l.b16 %v64
    %v129 = vunpack.c.l.b16 %v65
    %v130 = vunpack.c.l.b16 %v66
    %v131 = vunpack.c.l.b16 %v67
    %v132 = vunpack.c.l.b16 %v68
    %v133 = vunpack.c.l.b16 %v69
    %v134 = vunpack.c.l.b16 %v70
    %v135 = vunpack.c.l.b16 %v71
    %v136 = vunpack.c.l.b16 %v72
    %v137 = vunpack.c.l.b16 %v73
    %v138 = vunpack.c.l.b16 %v74
    %v139 = vunpack.c.l.b16 %v75
    %v140 = vunpack.c.l.b16 %v76
    %v141 = vunpack.c.l.b16 %v77
    %v142 = vunpack.c.l.b16 %v78
    %v143 = vunpack.c.l.b16 %v79
    %v144 = vunpack.c.l.b16 %v80
    %v145 = vunpack.c.l.b16 %v81
    %v146 = vunpack.c.l.b16 %v82
    %v147 = vunpack.c.l.b16 %v83
    %v148 = vunpack.c.l.b16 %v84
    %v149 = vunpack.c.l.b16 %v85
    %v150 = vunpack.c.l.b16 %v86
    %v151 = vunpack.c.l.b16 %v87
    %v152 = vunpack.c.l.b16 %v88
    %v153 = vunpack.c.l.b16 %v89
    %v154 = vunpack.c.l.b16 %v90
    %v155 = vunpack.c.l.b16 %v91
    %v156 = vunpack.c.l.b16 %v92
    %v157 = vunpack.c.l.b16 %v93
    %v158 = vunpack.c.l.b16 %v94
    %v159 = vpack.c.b16 %v128, %v127
    %v160 = vpack.c.b16 %v130, %v129
    %v161 = vpack.c.b16 %v132, %v131
    %v162 = vpack.c.b16 %v134, %v133
    %v163 = vpack.c.b16 %v136, %v135
    %v164 = vpack.c.b16 %v138, %v137
    %v165 = vpack.c.b16 %v140, %v139
    %v166 = vpack.c.b16 %v142, %v141
    %v167 = vpack.c.b16 %v144, %v143
    %v168 = vpack.c.b16 %v146, %v145
    %v169 = vpack.c.b16 %v148, %v147
    %v170 = vpack.c.b16 %v150, %v149
    %v171 = vpack.c.b16 %v152, %v151
    %v172 = vpack.c.b16 %v154, %v153
    %v173 = vpack.c.b16 %v156, %v155
    %v174 = vpack.c.b16 %v158, %v157
    %v175 = vrot.slane %v159, 7
    %v176 = vrot.slane %v160, 7
    %v177 = vrot.slane %v161, 7
    %v178 = vrot.slane %v162, 7
    %v179 = vrot.slane %v163, 7
    %v180 = vrot.slane %v164, 7
    %v181 = vrot.slane %v165, 7
    %v182 = vrot.slane %v166, 7
    %v183 = vrot.slane %v167, 7
    %v184 = vrot.slane %v168, 7
    %v185 = vrot.slane %v169, 7
    %v186 = vrot.slane %v170, 7
    %v187 = vrot.slane %v171, 7
    %v188 = vrot.slane %v172, 7
    %v189 = vrot.slane %v173, 7
    %v190 = vrot.slane %v174, 7
    %vm191 = vcmask 1040384
    %v194 = vsel %vm191, 0, %v175
    %v196 = vsel %vm191, 0, %v176
    %v198 = vsel %vm191, 0, %v177
    %v200 = vsel %vm191, 0, %v178
    %v202 = vsel %vm191, 0, %v179
    %v204 = vsel %vm191, 0, %v180
    %v206 = vsel %vm191, 0, %v181
    %v208 = vsel %vm191, 0, %v182
    %v210 = vsel %vm191, 0, %v183
    %v212 = vsel %vm191, 0, %v184
    %v214 = vsel %vm191, 0, %v185
    %v216 = vsel %vm191, 0, %v186
    %v218 = vsel %vm191, 0, %v187
    %v220 = vsel %vm191, 0, %v188
    %v222 = vsel %vm191, 0, %v189
    %v224 = vsel %vm191, 0, %v190
    %v225 = vsel %vm191, %v175, 0
    %v226 = vsel %vm191, %v176, 0
    %v227 = vsel %vm191, %v177, 0
    %v228 = vsel %vm191, %v178, 0
    %v229 = vsel %vm191, %v179, 0
    %v230 = vsel %vm191, %v180, 0
    %v231 = vsel %vm191, %v181, 0
    %v232 = vsel %vm191, %v182, 0
    %v233 = vsel %vm191, %v183, 0
    %v234 = vsel %vm191, %v184, 0
    %v235 = vsel %vm191, %v185, 0
    %v236 = vsel %vm191, %v186, 0
    %v237 = vsel %vm191, %v187, 0
    %v238 = vsel %vm191, %v188, 0
    %v239 = vsel %vm191, %v189, 0
    %v240 = vsel %vm191, %v190, 0
    %vm241 = vsmask.f32 7424
    %v242 = vshrl.u32 %v194, 16
    %v244 = vshll.u32 %v194, 16
    %v246 = vrot.slane %v244, 1
    %v247 = vor.u32 %v242, %v246
    %v248 = vshll.u32 %v225, 16
    %v250 = vrot.slane %v248, 1
    %v251 = vsel %vm241, %v247, %v250
    %v252 = vshrl.u32 %v196, 16
    %v254 = vshll.u32 %v196, 16
    %v256 = vrot.slane %v254, 1
    %v257 = vor.u32 %v252, %v256
    %v258 = vshll.u32 %v226, 16
    %v260 = vrot.slane %v258, 1
    %v261 = vsel %vm241, %v257, %v260
    %v262 = vshrl.u32 %v198, 16
    %v264 = vshll.u32 %v198, 16
    %v266 = vrot.slane %v264, 1
    %v267 = vor.u32 %v262, %v266
    %v268 = vshll.u32 %v227, 16
    %v270 = vrot.slane %v268, 1
    %v271 = vsel %vm241, %v267, %v270
    %v272 = vshrl.u32 %v200, 16
    %v274 = vshll.u32 %v200, 16
    %v276 = vrot.slane %v274, 1
    %v277 = vor.u32 %v272, %v276
    %v278 = vshll.u32 %v228, 16
    %v280 = vrot.slane %v278, 1
    %v281 = vsel %vm241, %v277, %v280
    %v282 = vshrl.u32 %v202, 16
    %v284 = vshll.u32 %v202, 16
    %v286 = vrot.slane %v284, 1
    %v287 = vor.u32 %v282, %v286
    %v288 = vshll.u32 %v229, 16
    %v290 = vrot.slane %v288, 1
    %v291 = vsel %vm241, %v287, %v290
    %v292 = vshrl.u32 %v204, 16
    %v294 = vshll.u32 %v204, 16
    %v296 = vrot.slane %v294, 1
    %v297 = vor.u32 %v292, %v296
    %v298 = vshll.u32 %v230, 16
    %v300 = vrot.slane %v298, 1
    %v301 = vsel %vm241, %v297, %v300
    %v302 = vshrl.u32 %v206, 16
    %v304 = vshll.u32 %v206, 16
    %v306 = vrot.slane %v304, 1
    %v307 = vor.u32 %v302, %v306
    %v308 = vshll.u32 %v231, 16
    %v310 = vrot.slane %v308, 1
    %v311 = vsel %vm241, %v307, %v310
    %v312 = vshrl.u32 %v208, 16
    %v314 = vshll.u32 %v208, 16
    %v316 = vrot.slane %v314, 1
    %v317 = vor.u32 %v312, %v316
    %v318 = vshll.u32 %v232, 16
    %v320 = vrot.slane %v318, 1
    %v321 = vsel %vm241, %v317, %v320
    %v322 = vshrl.u32 %v210, 16
    %v324 = vshll.u32 %v210, 16
    %v326 = vrot.slane %v324, 1
    %v327 = vor.u32 %v322, %v326
    %v328 = vshll.u32 %v233, 16
    %v330 = vrot.slane %v328, 1
    %v331 = vsel %vm241, %v327, %v330
    %v332 = vshrl.u32 %v212, 16
    %v334 = vshll.u32 %v212, 16
    %v336 = vrot.slane %v334, 1
    %v337 = vor.u32 %v332, %v336
    %v338 = vshll.u32 %v234, 16
    %v340 = vrot.slane %v338, 1
    %v341 = vsel %vm241, %v337, %v340
    %v342 = vshrl.u32 %v214, 16
    %v344 = vshll.u32 %v214, 16
    %v346 = vrot.slane %v344, 1
    %v347 = vor.u32 %v342, %v346
    %v348 = vshll.u32 %v235, 16
    %v350 = vrot.slane %v348, 1
    %v351 = vsel %vm241, %v347, %v350
    %v352 = vshrl.u32 %v216, 16
    %v354 = vshll.u32 %v216, 16
    %v356 = vrot.slane %v354, 1
    %v357 = vor.u32 %v352, %v356
    %v358 = vshll.u32 %v236, 16
    %v360 = vrot.slane %v358, 1
    %v361 = vsel %vm241, %v357, %v360
    %v362 = vshrl.u32 %v218, 16
    %v364 = vshll.u32 %v218, 16
    %v366 = vrot.slane %v364, 1
    %v367 = vor.u32 %v362, %v366
    %v368 = vshll.u32 %v237, 16
    %v370 = vrot.slane %v368, 1
    %v371 = vsel %vm241, %v367, %v370
    %v372 = vshrl.u32 %v220, 16
    %v374 = vshll.u32 %v220, 16
    %v376 = vrot.slane %v374, 1
    %v377 = vor.u32 %v372, %v376
    %v378 = vshll.u32 %v238, 16
    %v380 = vrot.slane %v378, 1
    %v381 = vsel %vm241, %v377, %v380
    %v382 = vshrl.u32 %v222, 16
    %v384 = vshll.u32 %v222, 16
    %v386 = vrot.slane %v384, 1
    %v387 = vor.u32 %v382, %v386
    %v388 = vshll.u32 %v239, 16
    %v390 = vrot.slane %v388, 1
    %v391 = vsel %vm241, %v387, %v390
    %v392 = vshrl.u32 %v224, 16
    %v394 = vshll.u32 %v224, 16
    %v396 = vrot.slane %v394, 1
    %v397 = vor.u32 %v392, %v396
    %v398 = vshll.u32 %v240, 16
    %v400 = vrot.slane %v398, 1
    %v401 = vsel %vm241, %v397, %v400
    %vm434 = vcmask 1046528
    %v435 = vrot.slane %v194, 1
    %v436 = vrot.slane %v225, 1
    %v437 = vsel %vm434, %v435, %v436
    %v438 = vrot.slane %v196, 1
    %v439 = vrot.slane %v226, 1
    %v440 = vsel %vm434, %v438, %v439
    %v441 = vrot.slane %v198, 1
    %v442 = vrot.slane %v227, 1
    %v443 = vsel %vm434, %v441, %v442
    %v444 = vrot.slane %v200, 1
    %v445 = vrot.slane %v228, 1
    %v446 = vsel %vm434, %v444, %v445
    %v447 = vrot.slane %v202, 1
    %v448 = vrot.slane %v229, 1
    %v449 = vsel %vm434, %v447, %v448
    %v450 = vrot.slane %v204, 1
    %v451 = vrot.slane %v230, 1
    %v452 = vsel %vm434, %v450, %v451
    %v453 = vrot.slane %v206, 1
    %v454 = vrot.slane %v231, 1
    %v455 = vsel %vm434, %v453, %v454
    %v456 = vrot.slane %v208, 1
    %v457 = vrot.slane %v232, 1
    %v458 = vsel %vm434, %v456, %v457
    %v459 = vrot.slane %v210, 1
    %v460 = vrot.slane %v233, 1
    %v461 = vsel %vm434, %v459, %v460
    %v462 = vrot.slane %v212, 1
    %v463 = vrot.slane %v234, 1
    %v464 = vsel %vm434, %v462, %v463
    %v465 = vrot.slane %v214, 1
    %v466 = vrot.slane %v235, 1
    %v467 = vsel %vm434, %v465, %v466
    %v468 = vrot.slane %v216, 1
    %v469 = vrot.slane %v236, 1
    %v470 = vsel %vm434, %v468, %v469
    %v471 = vrot.slane %v218, 1
    %v472 = vrot.slane %v237, 1
    %v473 = vsel %vm434, %v471, %v472
    %v474 = vrot.slane %v220, 1
    %v475 = vrot.slane %v238, 1
    %v476 = vsel %vm434, %v474, %v475
    %v477 = vrot.slane %v222, 1
    %v478 = vrot.slane %v239, 1
    %v479 = vsel %vm434, %v477, %v478
    %v480 = vrot.slane %v224, 1
    %v481 = vrot.slane %v240, 1
    %v482 = vsel %vm434, %v480, %v481
    %vm483 = vsmask.f32 6400
    %v484 = vrot.slane %v242, 1
    %v485 = vrot.slane %v244, 2
    %v486 = vor.u32 %v484, %v485
    %v487 = vshrl.u32 %v225, 16
    %v489 = vrot.slane %v487, 1
    %v490 = vrot.slane %v248, 2
    %v491 = vor.u32 %v489, %v490
    %v492 = vsel %vm483, %v486, %v491
    %v493 = vrot.slane %v252, 1
    %v494 = vrot.slane %v254, 2
    %v495 = vor.u32 %v493, %v494
    %v496 = vshrl.u32 %v226, 16
    %v498 = vrot.slane %v496, 1
    %v499 = vrot.slane %v258, 2
    %v500 = vor.u32 %v498, %v499
    %v501 = vsel %vm483, %v495, %v500
    %v502 = vrot.slane %v262, 1
    %v503 = vrot.slane %v264, 2
    %v504 = vor.u32 %v502, %v503
    %v505 = vshrl.u32 %v227, 16
    %v507 = vrot.slane %v505, 1
    %v508 = vrot.slane %v268, 2
    %v509 = vor.u32 %v507, %v508
    %v510 = vsel %vm483, %v504, %v509
    %v511 = vrot.slane %v272, 1
    %v512 = vrot.slane %v274, 2
    %v513 = vor.u32 %v511, %v512
    %v514 = vshrl.u32 %v228, 16
    %v516 = vrot.slane %v514, 1
    %v517 = vrot.slane %v278, 2
    %v518 = vor.u32 %v516, %v517
    %v519 = vsel %vm483, %v513, %v518
    %v520 = vrot.slane %v282, 1
    %v521 = vrot.slane %v284, 2
    %v522 = vor.u32 %v520, %v521
    %v523 = vshrl.u32 %v229, 16
    %v525 = vrot.slane %v523, 1
    %v526 = vrot.slane %v288, 2
    %v527 = vor.u32 %v525, %v526
    %v528 = vsel %vm483, %v522, %v527
    %v529 = vrot.slane %v292, 1
    %v530 = vrot.slane %v294, 2
    %v531 = vor.u32 %v529, %v530
    %v532 = vshrl.u32 %v230, 16
    %v534 = vrot.slane %v532, 1
    %v535 = vrot.slane %v298, 2
    %v536 = vor.u32 %v534, %v535
    %v537 = vsel %vm483, %v531, %v536
    %v538 = vrot.slane %v302, 1
    %v539 = vrot.slane %v304, 2
    %v540 = vor.u32 %v538, %v539
    %v541 = vshrl.u32 %v231, 16
    %v543 = vrot.slane %v541, 1
    %v544 = vrot.slane %v308, 2
    %v545 = vor.u32 %v543, %v544
    %v546 = vsel %vm483, %v540, %v545
    %v547 = vrot.slane %v312, 1
    %v548 = vrot.slane %v314, 2
    %v549 = vor.u32 %v547, %v548
    %v550 = vshrl.u32 %v232, 16
    %v552 = vrot.slane %v550, 1
    %v553 = vrot.slane %v318, 2
    %v554 = vor.u32 %v552, %v553
    %v555 = vsel %vm483, %v549, %v554
    %v556 = vrot.slane %v322, 1
    %v557 = vrot.slane %v324, 2
    %v558 = vor.u32 %v556, %v557
    %v559 = vshrl.u32 %v233, 16
    %v561 = vrot.slane %v559, 1
    %v562 = vrot.slane %v328, 2
    %v563 = vor.u32 %v561, %v562
    %v564 = vsel %vm483, %v558, %v563
    %v565 = vrot.slane %v332, 1
    %v566 = vrot.slane %v334, 2
    %v567 = vor.u32 %v565, %v566
    %v568 = vshrl.u32 %v234, 16
    %v570 = vrot.slane %v568, 1
    %v571 = vrot.slane %v338, 2
    %v572 = vor.u32 %v570, %v571
    %v573 = vsel %vm483, %v567, %v572
    %v574 = vrot.slane %v342, 1
    %v575 = vrot.slane %v344, 2
    %v576 = vor.u32 %v574, %v575
    %v577 = vshrl.u32 %v235, 16
    %v579 = vrot.slane %v577, 1
    %v580 = vrot.slane %v348, 2
    %v581 = vor.u32 %v579, %v580
    %v582 = vsel %vm483, %v576, %v581
    %v583 = vrot.slane %v352, 1
    %v584 = vrot.slane %v354, 2
    %v585 = vor.u32 %v583, %v584
    %v586 = vshrl.u32 %v236, 16
    %v588 = vrot.slane %v586, 1
    %v589 = vrot.slane %v358, 2
    %v590 = vor.u32 %v588, %v589
    %v591 = vsel %vm483, %v585, %v590
    %v592 = vrot.slane %v362, 1
    %v593 = vrot.slane %v364, 2
    %v594 = vor.u32 %v592, %v593
    %v595 = vshrl.u32 %v237, 16
    %v597 = vrot.slane %v595, 1
    %v598 = vrot.slane %v368, 2
    %v599 = vor.u32 %v597, %v598
    %v600 = vsel %vm483, %v594, %v599
    %v601 = vrot.slane %v372, 1
    %v602 = vrot.slane %v374, 2
    %v603 = vor.u32 %v601, %v602
    %v604 = vshrl.u32 %v238, 16
    %v606 = vrot.slane %v604, 1
    %v607 = vrot.slane %v378, 2
    %v608 = vor.u32 %v606, %v607
    %v609 = vsel %vm483, %v603, %v608
    %v610 = vrot.slane %v382, 1
    %v611 = vrot.slane %v384, 2
    %v612 = vor.u32 %v610, %v611
    %v613 = vshrl.u32 %v239, 16
    %v615 = vrot.slane %v613, 1
    %v616 = vrot.slane %v388, 2
    %v617 = vor.u32 %v615, %v616
    %v618 = vsel %vm483, %v612, %v617
    %v619 = vrot.slane %v392, 1
    %v620 = vrot.slane %v394, 2
    %v621 = vor.u32 %v619, %v620
    %v622 = vshrl.u32 %v240, 16
    %v624 = vrot.slane %v622, 1
    %v625 = vrot.slane %v398, 2
    %v626 = vor.u32 %v624, %v625
    %v627 = vsel %vm483, %v621, %v626
    %vm628 = vcmask 1045504
    %v629 = vrot.slane %v194, 2
    %v630 = vrot.slane %v225, 2
    %v631 = vsel %vm628, %v629, %v630
    %v632 = vrot.slane %v196, 2
    %v633 = vrot.slane %v226, 2
    %v634 = vsel %vm628, %v632, %v633
    %v635 = vrot.slane %v198, 2
    %v636 = vrot.slane %v227, 2
    %v637 = vsel %vm628, %v635, %v636
    %v638 = vrot.slane %v200, 2
    %v639 = vrot.slane %v228, 2
    %v640 = vsel %vm628, %v638, %v639
    %v641 = vrot.slane %v202, 2
    %v642 = vrot.slane %v229, 2
    %v643 = vsel %vm628, %v641, %v642
    %v644 = vrot.slane %v204, 2
    %v645 = vrot.slane %v230, 2
    %v646 = vsel %vm628, %v644, %v645
    %v647 = vrot.slane %v206, 2
    %v648 = vrot.slane %v231, 2
    %v649 = vsel %vm628, %v647, %v648
    %v650 = vrot.slane %v208, 2
    %v651 = vrot.slane %v232, 2
    %v652 = vsel %vm628, %v650, %v651
    %v653 = vrot.slane %v210, 2
    %v654 = vrot.slane %v233, 2
    %v655 = vsel %vm628, %v653, %v654
    %v656 = vrot.slane %v212, 2
    %v657 = vrot.slane %v234, 2
    %v658 = vsel %vm628, %v656, %v657
    %v659 = vrot.slane %v214, 2
    %v660 = vrot.slane %v235, 2
    %v661 = vsel %vm628, %v659, %v660
    %v662 = vrot.slane %v216, 2
    %v663 = vrot.slane %v236, 2
    %v664 = vsel %vm628, %v662, %v663
    %v665 = vrot.slane %v218, 2
    %v666 = vrot.slane %v237, 2
    %v667 = vsel %vm628, %v665, %v666
    %v668 = vrot.slane %v220, 2
    %v669 = vrot.slane %v238, 2
    %v670 = vsel %vm628, %v668, %v669
    %v671 = vrot.slane %v222, 2
    %v672 = vrot.slane %v239, 2
    %v673 = vsel %vm628, %v671, %v672
    %v674 = vrot.slane %v224, 2
    %v675 = vrot.slane %v240, 2
    %v676 = vsel %vm628, %v674, %v675
    %677 = vrot.lane.b32.xlu0 %v251, 32
    %v678 = vpop.permute.xlu0 %677
    %679 = vrot.lane.b32.xlu0 %v261, 32
    %v680 = vpop.permute.xlu0 %679
    %681 = vrot.lane.b32.xlu0 %v271, 32
    %v682 = vpop.permute.xlu0 %681
    %683 = vrot.lane.b32.xlu0 %v281, 32
    %v684 = vpop.permute.xlu0 %683
    %685 = vrot.lane.b32.xlu0 %v291, 32
    %v686 = vpop.permute.xlu0 %685
    %687 = vrot.lane.b32.xlu0 %v301, 32
    %v688 = vpop.permute.xlu0 %687
    %689 = vrot.lane.b32.xlu0 %v311, 32
    %v690 = vpop.permute.xlu0 %689
    %691 = vrot.lane.b32.xlu0 %v321, 32
    %v692 = vpop.permute.xlu0 %691
    %693 = vrot.lane.b32.xlu0 %v331, 32
    %v694 = vpop.permute.xlu0 %693
    %695 = vrot.lane.b32.xlu0 %v341, 32
    %v696 = vpop.permute.xlu0 %695
    %697 = vrot.lane.b32.xlu0 %v351, 32
    %v698 = vpop.permute.xlu0 %697
    %699 = vrot.lane.b32.xlu0 %v361, 32
    %v700 = vpop.permute.xlu0 %699
    %701 = vrot.lane.b32.xlu0 %v371, 32
    %v702 = vpop.permute.xlu0 %701
    %703 = vrot.lane.b32.xlu0 %v381, 32
    %v704 = vpop.permute.xlu0 %703
    %705 = vrot.lane.b32.xlu0 %v391, 32
    %v706 = vpop.permute.xlu0 %705
    %707 = vrot.lane.b32.xlu0 %v401, 32
    %v708 = vpop.permute.xlu0 %707
    %709 = vrot.lane.b32.xlu0 %v437, 64
    %v710 = vpop.permute.xlu0 %709
    %711 = vrot.lane.b32.xlu0 %v440, 64
    %v712 = vpop.permute.xlu0 %711
    %713 = vrot.lane.b32.xlu0 %v443, 64
    %v714 = vpop.permute.xlu0 %713
    %715 = vrot.lane.b32.xlu0 %v446, 64
    %v716 = vpop.permute.xlu0 %715
    %717 = vrot.lane.b32.xlu0 %v449, 64
    %v718 = vpop.permute.xlu0 %717
    %719 = vrot.lane.b32.xlu0 %v452, 64
    %v720 = vpop.permute.xlu0 %719
    %721 = vrot.lane.b32.xlu0 %v455, 64
    %v722 = vpop.permute.xlu0 %721
    %723 = vrot.lane.b32.xlu0 %v458, 64
    %v724 = vpop.permute.xlu0 %723
    %725 = vrot.lane.b32.xlu0 %v461, 64
    %v726 = vpop.permute.xlu0 %725
    %727 = vrot.lane.b32.xlu0 %v464, 64
    %v728 = vpop.permute.xlu0 %727
    %729 = vrot.lane.b32.xlu0 %v467, 64
    %v730 = vpop.permute.xlu0 %729
    %731 = vrot.lane.b32.xlu0 %v470, 64
    %v732 = vpop.permute.xlu0 %731
    %733 = vrot.lane.b32.xlu0 %v473, 64
    %v734 = vpop.permute.xlu0 %733
    %735 = vrot.lane.b32.xlu0 %v476, 64
    %v736 = vpop.permute.xlu0 %735
    %737 = vrot.lane.b32.xlu0 %v479, 64
    %v738 = vpop.permute.xlu0 %737
    %739 = vrot.lane.b32.xlu0 %v482, 64
    %v740 = vpop.permute.xlu0 %739
    %741 = vrot.lane.b32.xlu0 %v492, 96
    %v742 = vpop.permute.xlu0 %741
    %743 = vrot.lane.b32.xlu0 %v501, 96
    %v744 = vpop.permute.xlu0 %743
    %745 = vrot.lane.b32.xlu0 %v510, 96
    %v746 = vpop.permute.xlu0 %745
    %747 = vrot.lane.b32.xlu0 %v519, 96
    %v748 = vpop.permute.xlu0 %747
    %749 = vrot.lane.b32.xlu0 %v528, 96
    %v750 = vpop.permute.xlu0 %749
    %751 = vrot.lane.b32.xlu0 %v537, 96
    %v752 = vpop.permute.xlu0 %751
    %753 = vrot.lane.b32.xlu0 %v546, 96
    %v754 = vpop.permute.xlu0 %753
    %755 = vrot.lane.b32.xlu0 %v555, 96
    %v756 = vpop.permute.xlu0 %755
    %757 = vrot.lane.b32.xlu0 %v564, 96
    %v758 = vpop.permute.xlu0 %757
    %759 = vrot.lane.b32.xlu0 %v573, 96
    %v760 = vpop.permute.xlu0 %759
    %761 = vrot.lane.b32.xlu0 %v582, 96
    %v762 = vpop.permute.xlu0 %761
    %763 = vrot.lane.b32.xlu0 %v591, 96
    %v764 = vpop.permute.xlu0 %763
    %765 = vrot.lane.b32.xlu0 %v600, 96
    %v766 = vpop.permute.xlu0 %765
    %767 = vrot.lane.b32.xlu0 %v609, 96
    %v768 = vpop.permute.xlu0 %767
    %769 = vrot.lane.b32.xlu0 %v618, 96
    %v770 = vpop.permute.xlu0 %769
    %771 = vrot.lane.b32.xlu0 %v627, 96
    %v772 = vpop.permute.xlu0 %771
    %vm773 = vcmask 261120
    %v775 = vsel %vm773, %v194, %v678
    %v777 = vsel %vm773, %v196, %v680
    %v779 = vsel %vm773, %v198, %v682
    %v781 = vsel %vm773, %v200, %v684
    %v783 = vsel %vm773, %v202, %v686
    %v785 = vsel %vm773, %v204, %v688
    %v787 = vsel %vm773, %v206, %v690
    %v789 = vsel %vm773, %v208, %v692
    %v791 = vsel %vm773, %v210, %v694
    %v793 = vsel %vm773, %v212, %v696
    %v795 = vsel %vm773, %v214, %v698
    %v797 = vsel %vm773, %v216, %v700
    %v799 = vsel %vm773, %v218, %v702
    %v801 = vsel %vm773, %v220, %v704
    %v803 = vsel %vm773, %v222, %v706
    %v805 = vsel %vm773, %v224, %v708
    %vm806 = vcmask 523264
    %v808 = vsel %vm806, %v775, %v710
    %v810 = vsel %vm806, %v777, %v712
    %v812 = vsel %vm806, %v779, %v714
    %v814 = vsel %vm806, %v781, %v716
    %v816 = vsel %vm806, %v783, %v718
    %v818 = vsel %vm806, %v785, %v720
    %v820 = vsel %vm806, %v787, %v722
    %v822 = vsel %vm806, %v789, %v724
    %v824 = vsel %vm806, %v791, %v726
    %v826 = vsel %vm806, %v793, %v728
    %v828 = vsel %vm806, %v795, %v730
    %v830 = vsel %vm806, %v797, %v732
    %v832 = vsel %vm806, %v799, %v734
    %v834 = vsel %vm806, %v801, %v736
    %v836 = vsel %vm806, %v803, %v738
    %v838 = vsel %vm806, %v805, %v740
    %vm839 = vcmask 785408
    %v841 = vsel %vm839, %v808, %v742
    %v844 = vsel %vm839, %v810, %v744
    %v847 = vsel %vm839, %v812, %v746
    %v850 = vsel %vm839, %v814, %v748
    %v853 = vsel %vm839, %v816, %v750
    %v856 = vsel %vm839, %v818, %v752
    %v859 = vsel %vm839, %v820, %v754
    %v862 = vsel %vm839, %v822, %v756
    %v865 = vsel %vm839, %v824, %v758
    %v868 = vsel %vm839, %v826, %v760
    %v871 = vsel %vm839, %v828, %v762
    %v874 = vsel %vm839, %v830, %v764
    %v877 = vsel %vm839, %v832, %v766
    %v880 = vsel %vm839, %v834, %v768
    %v883 = vsel %vm839, %v836, %v770
    %v886 = vsel %vm839, %v838, %v772
    %v888 = vld [vmem:[#allocation5] sm:$0xf]
    %v889 = vld [vmem:[#allocation5 + $0x4] sm:$0xf]
    %v890 = vld [vmem:[#allocation5 + $0x8] sm:$0xf]
    %v891 = vld [vmem:[#allocation5 + $0xc] sm:$0xf]
    %v892 = vld [vmem:[#allocation5 + $0x10] sm:$0xf]
    %v893 = vld [vmem:[#allocation5 + $0x14] sm:$0xf]
    %v894 = vld [vmem:[#allocation5 + $0x18] sm:$0xf]
    %v895 = vld [vmem:[#allocation5 + $0x1c] sm:$0xf]
    %v896 = vld [vmem:[#allocation5 + $0x20] sm:$0xf]
    %v897 = vld [vmem:[#allocation5 + $0x24] sm:$0xf]
    %v898 = vld [vmem:[#allocation5 + $0x28] sm:$0xf]
    %v899 = vld [vmem:[#allocation5 + $0x2c] sm:$0xf]
    %v900 = vld [vmem:[#allocation5 + $0x30] sm:$0xf]
    %v901 = vld [vmem:[#allocation5 + $0x34] sm:$0xf]
    %v902 = vld [vmem:[#allocation5 + $0x38] sm:$0xf]
    %v903 = vld [vmem:[#allocation5 + $0x3c] sm:$0xf]
    %v904 = vld [vmem:[#allocation5 + $0x40] sm:$0xf]
    %v905 = vld [vmem:[#allocation5 + $0x44] sm:$0xf]
    %v906 = vld [vmem:[#allocation5 + $0x48] sm:$0xf]
    %v907 = vld [vmem:[#allocation5 + $0x4c] sm:$0xf]
    %v928 = vunpack.c.l.b16 %v888
    %v929 = vunpack.c.l.b16 %v889
    %v930 = vunpack.c.l.b16 %v890
    %v931 = vunpack.c.l.b16 %v891
    %v932 = vunpack.c.l.b16 %v892
    %v933 = vunpack.c.l.b16 %v893
    %v934 = vunpack.c.l.b16 %v894
    %v935 = vunpack.c.l.b16 %v895
    %v936 = vunpack.c.l.b16 %v896
    %v937 = vunpack.c.l.b16 %v897
    %v938 = vunpack.c.l.b16 %v898
    %v939 = vunpack.c.l.b16 %v899
    %v940 = vunpack.c.l.b16 %v900
    %v941 = vunpack.c.l.b16 %v901
    %v942 = vunpack.c.l.b16 %v902
    %v943 = vunpack.c.l.b16 %v903
    %v944 = vunpack.c.l.b16 %v904
    %v945 = vunpack.c.l.b16 %v905
    %v946 = vunpack.c.l.b16 %v906
    %v947 = vunpack.c.l.b16 %v907
    %v948 = vpack.c.b16 %v929, %v928
    %v949 = vpack.c.b16 %v931, %v930
    %v950 = vpack.c.b16 %v933, %v932
    %v951 = vpack.c.b16 %v935, %v934
    %v952 = vpack.c.b16 %v937, %v936
    %v953 = vpack.c.b16 %v939, %v938
    %v954 = vpack.c.b16 %v941, %v940
    %v955 = vpack.c.b16 %v943, %v942
    %v956 = vpack.c.b16 %v945, %v944
    %v957 = vpack.c.b16 %v947, %v946
    %v969 = vsel %vm773, %v631, 0
    %v972 = vsel %vm773, %v634, 0
    %v975 = vsel %vm773, %v637, 0
    %v978 = vsel %vm773, %v640, 0
    %v981 = vsel %vm773, %v643, 0
    %v984 = vsel %vm773, %v646, 0
    %v987 = vsel %vm773, %v649, 0
    %v990 = vsel %vm773, %v652, 0
    %v993 = vsel %vm773, %v655, 0
    %v996 = vsel %vm773, %v658, 0
    %v999 = vsel %vm773, %v661, 0
    %v1002 = vsel %vm773, %v664, 0
    %v1005 = vsel %vm773, %v667, 0
    %v1008 = vsel %vm773, %v670, 0
    %v1011 = vsel %vm773, %v673, 0
    %v1014 = vsel %vm773, %v676, 0
    %1016 = vmatprep.subr.bf16.mxu0 0
    %1017 = vmatpush1.bf16.msra.mxu0 %v948
    %1018 = vmatprep.subr.bf16.mxu0 0
    %1019 = vmatpush1.bf16.msra.mxu0 %v949
    %1020 = vmatprep.subr.bf16.mxu0 0
    %1021 = vmatpush1.bf16.msra.mxu0 %v950
    %1022 = vmatprep.subr.bf16.mxu0 0
    %1023 = vmatpush1.bf16.msra.mxu0 %v951
    %1024 = vmatprep.subr.bf16.mxu0 0
    %1025 = vmatpush1.bf16.msra.mxu0 %v952
    %1026 = vmatprep.subr.bf16.mxu0 0
    %1027 = vmatpush1.bf16.msra.mxu0 %v953
    %1028 = vmatprep.subr.bf16.mxu0 0
    %1029 = vmatpush1.bf16.msra.mxu0 %v954
    %1030 = vmatprep.subr.bf16.mxu0 0
    %1031 = vmatpush1.bf16.msra.mxu0 %v955
    %1032 = vmatprep.subr.bf16.mxu0 0
    %1033 = vmatpush1.bf16.msra.mxu0 %v956
    %1034 = vmatprep.subr.bf16.mxu0 0
    %1035 = vmatpush1.bf16.msra.mxu0 %v957
    %1036 = vmatprep.subr.bf16.mxu0 0
    %1037 = vmatpush1.bf16.msra.mxu0 0
    %1038 = vmatprep.subr.bf16.mxu0 0
    %1039 = vmatpush1.bf16.msra.mxu0 0
    %1040 = vmatprep.subr.bf16.mxu0 0
    %1041 = vmatpush1.bf16.msra.mxu0 0
    %1042 = vmatprep.subr.bf16.mxu0 0
    %1043 = vmatpush1.bf16.msra.mxu0 0
    %1044 = vmatprep.subr.bf16.mxu0 0
    %1045 = vmatpush1.bf16.msra.mxu0 0
    %1046 = vmatprep.subr.bf16.mxu0 0
    %1047 = vmatpush1.bf16.msra.mxu0 0
    %1048 = vmatprep.mubr.bf16.mxu0 %v969
    %1049 = vmatmul.mubr.bf16.gmra.mrb[0].mxu0 %v841
    %v1050 = vpop.f32.mrb[0].mxu0
    %v1051 = vadd.f32 0.0, %v1050
    %v1052 = vpop.f32.mrb[0].mxu0
    %v1053 = vpop.f32.mrb[0].mxu0
    %v1054 = vadd.f32 0.0, %v1053
    %v1055 = vpop.f32.mrb[0].mxu0
    %1056 = vmatprep.mubr.bf16.mxu0 %v972
    %1057 = vmatmul.mubr.bf16.gmra.mrb[0].mxu0 %v844
    %v1058 = vpop.f32.mrb[0].mxu0
    %v1059 = vadd.f32 0.0, %v1058
    %v1060 = vpop.f32.mrb[0].mxu0
    %v1061 = vpop.f32.mrb[0].mxu0
    %v1062 = vadd.f32 0.0, %v1061
    %v1063 = vpop.f32.mrb[0].mxu0
    %1064 = vmatprep.mubr.bf16.mxu0 %v975
    %1065 = vmatmul.mubr.bf16.gmra.mrb[0].mxu0 %v847
    %v1066 = vpop.f32.mrb[0].mxu0
    %v1067 = vadd.f32 0.0, %v1066
    %v1068 = vpop.f32.mrb[0].mxu0
    %v1069 = vpop.f32.mrb[0].mxu0
    %v1070 = vadd.f32 0.0, %v1069
    %v1071 = vpop.f32.mrb[0].mxu0
    %1072 = vmatprep.mubr.bf16.mxu0 %v978
    %1073 = vmatmul.mubr.bf16.gmra.mrb[0].mxu0 %v850
    %v1074 = vpop.f32.mrb[0].mxu0
    %v1075 = vadd.f32 0.0, %v1074
    %v1076 = vpop.f32.mrb[0].mxu0
    %v1077 = vpop.f32.mrb[0].mxu0
    %v1078 = vadd.f32 0.0, %v1077
    %v1079 = vpop.f32.mrb[0].mxu0
    %1080 = vmatprep.mubr.bf16.mxu0 %v981
    %1081 = vmatmul.mubr.bf16.gmra.mrb[0].mxu0 %v853
    %v1082 = vpop.f32.mrb[0].mxu0
    %v1083 = vadd.f32 0.0, %v1082
    %v1084 = vpop.f32.mrb[0].mxu0
    %v1085 = vpop.f32.mrb[0].mxu0
    %v1086 = vadd.f32 0.0, %v1085
    %v1087 = vpop.f32.mrb[0].mxu0
    %1088 = vmatprep.mubr.bf16.mxu0 %v984
    %1089 = vmatmul.mubr.bf16.gmra.mrb[0].mxu0 %v856
    %v1090 = vpop.f32.mrb[0].mxu0
    %v1091 = vadd.f32 0.0, %v1090
    %v1092 = vpop.f32.mrb[0].mxu0
    %v1093 = vpop.f32.mrb[0].mxu0
    %v1094 = vadd.f32 0.0, %v1093
    %v1095 = vpop.f32.mrb[0].mxu0
    %1096 = vmatprep.mubr.bf16.mxu0 %v987
    %1097 = vmatmul.mubr.bf16.gmra.mrb[0].mxu0 %v859
    %v1098 = vpop.f32.mrb[0].mxu0
    %v1099 = vadd.f32 0.0, %v1098
    %v1100 = vpop.f32.mrb[0].mxu0
    %v1101 = vpop.f32.mrb[0].mxu0
    %v1102 = vadd.f32 0.0, %v1101
    %v1103 = vpop.f32.mrb[0].mxu0
    %1104 = vmatprep.mubr.bf16.mxu0 %v990
    %1105 = vmatmul.mubr.bf16.gmra.mrb[0].mxu0 %v862
    %v1106 = vpop.f32.mrb[0].mxu0
    %v1107 = vadd.f32 0.0, %v1106
    %v1108 = vpop.f32.mrb[0].mxu0
    %v1109 = vpop.f32.mrb[0].mxu0
    %v1110 = vadd.f32 0.0, %v1109
    %v1111 = vpop.f32.mrb[0].mxu0
    %1112 = vmatprep.mubr.bf16.mxu0 %v993
    %1113 = vmatmul.mubr.bf16.gmra.mrb[0].mxu0 %v865
    %v1114 = vpop.f32.mrb[0].mxu0
    %v1115 = vadd.f32 0.0, %v1114
    %v1116 = vpop.f32.mrb[0].mxu0
    %v1117 = vpop.f32.mrb[0].mxu0
    %v1118 = vadd.f32 0.0, %v1117
    %v1119 = vpop.f32.mrb[0].mxu0
    %1120 = vmatprep.mubr.bf16.mxu0 %v996
    %1121 = vmatmul.mubr.bf16.gmra.mrb[0].mxu0 %v868
    %v1122 = vpop.f32.mrb[0].mxu0
    %v1123 = vadd.f32 0.0, %v1122
    %v1124 = vpop.f32.mrb[0].mxu0
    %v1125 = vpop.f32.mrb[0].mxu0
    %v1126 = vadd.f32 0.0, %v1125
    %v1127 = vpop.f32.mrb[0].mxu0
    %1128 = vmatprep.mubr.bf16.mxu0 %v999
    %1129 = vmatmul.mubr.bf16.gmra.mrb[0].mxu0 %v871
    %v1130 = vpop.f32.mrb[0].mxu0
    %v1131 = vadd.f32 0.0, %v1130
    %v1132 = vpop.f32.mrb[0].mxu0
    %v1133 = vpop.f32.mrb[0].mxu0
    %v1134 = vadd.f32 0.0, %v1133
    %v1135 = vpop.f32.mrb[0].mxu0
    %1136 = vmatprep.mubr.bf16.mxu0 %v1002
    %1137 = vmatmul.mubr.bf16.gmra.mrb[0].mxu0 %v874
    %v1138 = vpop.f32.mrb[0].mxu0
    %v1139 = vadd.f32 0.0, %v1138
    %v1140 = vpop.f32.mrb[0].mxu0
    %v1141 = vpop.f32.mrb[0].mxu0
    %v1142 = vadd.f32 0.0, %v1141
    %v1143 = vpop.f32.mrb[0].mxu0
    %1144 = vmatprep.mubr.bf16.mxu0 %v1005
    %1145 = vmatmul.mubr.bf16.gmra.mrb[0].mxu0 %v877
    %v1146 = vpop.f32.mrb[0].mxu0
    %v1147 = vadd.f32 0.0, %v1146
    %v1148 = vpop.f32.mrb[0].mxu0
    %v1149 = vpop.f32.mrb[0].mxu0
    %v1150 = vadd.f32 0.0, %v1149
    %v1151 = vpop.f32.mrb[0].mxu0
    %1152 = vmatprep.mubr.bf16.mxu0 %v1008
    %1153 = vmatmul.mubr.bf16.gmra.mrb[0].mxu0 %v880
    %v1154 = vpop.f32.mrb[0].mxu0
    %v1155 = vadd.f32 0.0, %v1154
    %v1156 = vpop.f32.mrb[0].mxu0
    %v1157 = vpop.f32.mrb[0].mxu0
    %v1158 = vadd.f32 0.0, %v1157
    %v1159 = vpop.f32.mrb[0].mxu0
    %1160 = vmatprep.mubr.bf16.mxu0 %v1011
    %1161 = vmatmul.mubr.bf16.gmra.mrb[0].mxu0 %v883
    %v1162 = vpop.f32.mrb[0].mxu0
    %v1163 = vadd.f32 0.0, %v1162
    %v1164 = vpop.f32.mrb[0].mxu0
    %v1165 = vpop.f32.mrb[0].mxu0
    %v1166 = vadd.f32 0.0, %v1165
    %v1167 = vpop.f32.mrb[0].mxu0
    %1168 = vmatprep.mubr.bf16.mxu0 %v1014
    %1169 = vmatmul.mubr.bf16.gmra.mrb[0].mxu0 %v886
    %v1170 = vpop.f32.mrb[0].mxu0
    %v1171 = vadd.f32 0.0, %v1170
    %v1172 = vpop.f32.mrb[0].mxu0
    %v1173 = vpop.f32.mrb[0].mxu0
    %v1174 = vadd.f32 0.0, %v1173
    %v1175 = vpop.f32.mrb[0].mxu0
    %1176 = vdwg.mxu0
    %v1177 = vmax.f32 %v1051, 0.0
    %v1178 = vmax.f32 %v1054, 0.0
    %v1179 = vmax.f32 %v1059, 0.0
    %v1180 = vmax.f32 %v1062, 0.0
    %v1181 = vmax.f32 %v1067, 0.0
    %v1182 = vmax.f32 %v1070, 0.0
    %v1183 = vmax.f32 %v1075, 0.0
    %v1184 = vmax.f32 %v1078, 0.0
    %v1185 = vmax.f32 %v1083, 0.0
    %v1186 = vmax.f32 %v1086, 0.0
    %v1187 = vmax.f32 %v1091, 0.0
    %v1188 = vmax.f32 %v1094, 0.0
    %v1189 = vmax.f32 %v1099, 0.0
    %v1190 = vmax.f32 %v1102, 0.0
    %v1191 = vmax.f32 %v1107, 0.0
    %v1192 = vmax.f32 %v1110, 0.0
    %v1193 = vmax.f32 %v1115, 0.0
    %v1194 = vmax.f32 %v1118, 0.0
    %v1195 = vmax.f32 %v1123, 0.0
    %v1196 = vmax.f32 %v1126, 0.0
    %v1197 = vmax.f32 %v1131, 0.0
    %v1198 = vmax.f32 %v1134, 0.0
    %v1199 = vmax.f32 %v1139, 0.0
    %v1200 = vmax.f32 %v1142, 0.0
    %v1201 = vmax.f32 %v1147, 0.0
    %v1202 = vmax.f32 %v1150, 0.0
    %v1203 = vmax.f32 %v1155, 0.0
    %v1204 = vmax.f32 %v1158, 0.0
    %v1205 = vmax.f32 %v1163, 0.0
    %v1206 = vmax.f32 %v1166, 0.0
    %v1207 = vmax.f32 %v1171, 0.0
    %v1208 = vmax.f32 %v1174, 0.0
    %v1209 = vlaneseq
    %v1210 = vshrl.u32 %v1209, 7
    %v1211 = vadd.s32 %v1210, 8
    %v1212 = vld [vmem:[%s1] sm:$0xff]
    %v1213 = vld [vmem:[%s1 + $0x8] sm:$0xff]
    %v1214 = vcombine.high %v1212, %v1212
    %v1216 = vunpack.c.l.s4 1966171168
    %v1217 = vunpack.c.0.s8 %v1216
    %v1218 = vlaneseq
    %v1219 = vshrl.u32 %v1218, 7
    %v1220 = vsub.s32 %v1217, %v1219
    %v1221 = vrot.slane %v1212, %v1220
    %v1223 = vunpack.c.l.s4 1966171168
    %v1224 = vunpack.c.0.s8 %v1223
    %v1225 = vlaneseq
    %v1226 = vshrl.u32 %v1225, 7
    %v1227 = vsub.s32 %v1224, %v1226
    %v1228 = vrot.slane %v1214, %v1227
    %v1229 = vcombine.high %v1221, %v1221
    %v1230 = vcombine.high %v1228, %v1228
    %v1232 = vunpack.c.l.s4 1966171168
    %v1233 = vunpack.c.0.s8 %v1232
    %v1234 = vlaneseq
    %v1235 = vshrl.u32 %v1234, 7
    %v1236 = vsub.s32 %v1233, %v1235
    %v1237 = vrot.slane %v1221, %v1236
    %v1239 = vunpack.c.l.s4 1966171168
    %v1240 = vunpack.c.0.s8 %v1239
    %v1241 = vlaneseq
    %v1242 = vshrl.u32 %v1241, 7
    %v1243 = vsub.s32 %v1240, %v1242
    %v1244 = vrot.slane %v1228, %v1243
    %v1246 = vunpack.c.l.s4 1966171168
    %v1247 = vunpack.c.0.s8 %v1246
    %v1248 = vlaneseq
    %v1249 = vshrl.u32 %v1248, 7
    %v1250 = vsub.s32 %v1247, %v1249
    %v1251 = vrot.slane %v1229, %v1250
    %v1253 = vunpack.c.l.s4 1966171168
    %v1254 = vunpack.c.0.s8 %v1253
    %v1255 = vlaneseq
    %v1256 = vshrl.u32 %v1255, 7
    %v1257 = vsub.s32 %v1254, %v1256
    %v1258 = vrot.slane %v1230, %v1257
    %v1259 = vcombine.high %v1237, %v1237
    %v1260 = vcombine.high %v1244, %v1244
    %v1261 = vcombine.high %v1251, %v1251
    %v1262 = vcombine.high %v1258, %v1258
    %v1263 = vcombine.high %v1213, %v1213
    %v1265 = vunpack.c.l.s4 1966171168
    %v1266 = vunpack.c.0.s8 %v1265
    %v1267 = vlaneseq
    %v1268 = vshrl.u32 %v1267, 7
    %v1269 = vsub.s32 %v1266, %v1268
    %v1270 = vrot.slane %v1213, %v1269
    %v1272 = vunpack.c.l.s4 1966171168
    %v1273 = vunpack.c.0.s8 %v1272
    %v1274 = vlaneseq
    %v1275 = vshrl.u32 %v1274, 7
    %v1276 = vsub.s32 %v1273, %v1275
    %v1277 = vrot.slane %v1263, %v1276
    %v1278 = vcombine.high %v1270, %v1270
    %v1279 = vcombine.high %v1277, %v1277
    %v1281 = vunpack.c.l.s4 1966171168
    %v1282 = vunpack.c.0.s8 %v1281
    %v1283 = vlaneseq
    %v1284 = vshrl.u32 %v1283, 7
    %v1285 = vsub.s32 %v1282, %v1284
    %v1286 = vrot.slane %v1270, %v1285
    %v1288 = vunpack.c.l.s4 1966171168
    %v1289 = vunpack.c.0.s8 %v1288
    %v1290 = vlaneseq
    %v1291 = vshrl.u32 %v1290, 7
    %v1292 = vsub.s32 %v1289, %v1291
    %v1293 = vrot.slane %v1277, %v1292
    %v1295 = vunpack.c.l.s4 1966171168
    %v1296 = vunpack.c.0.s8 %v1295
    %v1297 = vlaneseq
    %v1298 = vshrl.u32 %v1297, 7
    %v1299 = vsub.s32 %v1296, %v1298
    %v1300 = vrot.slane %v1278, %v1299
    %v1302 = vunpack.c.l.s4 1966171168
    %v1303 = vunpack.c.0.s8 %v1302
    %v1304 = vlaneseq
    %v1305 = vshrl.u32 %v1304, 7
    %v1306 = vsub.s32 %v1303, %v1305
    %v1307 = vrot.slane %v1279, %v1306
    %v1308 = vcombine.high %v1286, %v1286
    %v1309 = vcombine.high %v1293, %v1293
    %v1310 = vcombine.high %v1300, %v1300
    %v1311 = vcombine.high %v1307, %v1307
    %v1312 = vlaneseq
    %v1313 = vshrl.u32 %v1312, 7
    %v1314 = vsub.s32 0, %v1313
    %v1315 = vrot.slane %v1237, %v1314
    %v1316 = vlaneseq
    %v1317 = vshrl.u32 %v1316, 7
    %v1318 = vsub.s32 0, %v1317
    %v1319 = vrot.slane %v1251, %v1318
    %v1320 = vlaneseq
    %v1321 = vshrl.u32 %v1320, 7
    %v1322 = vsub.s32 0, %v1321
    %v1323 = vrot.slane %v1259, %v1322
    %v1324 = vlaneseq
    %v1325 = vshrl.u32 %v1324, 7
    %v1326 = vsub.s32 0, %v1325
    %v1327 = vrot.slane %v1261, %v1326
    %v1328 = vlaneseq
    %v1329 = vshrl.u32 %v1328, 7
    %v1330 = vsub.s32 0, %v1329
    %v1331 = vrot.slane %v1244, %v1330
    %v1332 = vlaneseq
    %v1333 = vshrl.u32 %v1332, 7
    %v1334 = vsub.s32 0, %v1333
    %v1335 = vrot.slane %v1258, %v1334
    %v1336 = vlaneseq
    %v1337 = vshrl.u32 %v1336, 7
    %v1338 = vsub.s32 0, %v1337
    %v1339 = vrot.slane %v1260, %v1338
    %v1340 = vlaneseq
    %v1341 = vshrl.u32 %v1340, 7
    %v1342 = vsub.s32 0, %v1341
    %v1343 = vrot.slane %v1262, %v1342
    %v1344 = vlaneseq
    %v1345 = vshrl.u32 %v1344, 7
    %v1346 = vsub.s32 0, %v1345
    %v1347 = vrot.slane %v1286, %v1346
    %v1348 = vlaneseq
    %v1349 = vshrl.u32 %v1348, 7
    %v1350 = vsub.s32 0, %v1349
    %v1351 = vrot.slane %v1300, %v1350
    %v1352 = vlaneseq
    %v1353 = vshrl.u32 %v1352, 7
    %v1354 = vsub.s32 0, %v1353
    %v1355 = vrot.slane %v1308, %v1354
    %v1356 = vlaneseq
    %v1357 = vshrl.u32 %v1356, 7
    %v1358 = vsub.s32 0, %v1357
    %v1359 = vrot.slane %v1310, %v1358
    %v1360 = vlaneseq
    %v1361 = vshrl.u32 %v1360, 7
    %v1362 = vsub.s32 0, %v1361
    %v1363 = vrot.slane %v1293, %v1362
    %v1364 = vlaneseq
    %v1365 = vshrl.u32 %v1364, 7
    %v1366 = vsub.s32 0, %v1365
    %v1367 = vrot.slane %v1307, %v1366
    %v1368 = vlaneseq
    %v1369 = vshrl.u32 %v1368, 7
    %v1370 = vsub.s32 0, %v1369
    %v1371 = vrot.slane %v1309, %v1370
    %v1372 = vlaneseq
    %v1373 = vshrl.u32 %v1372, 7
    %v1374 = vsub.s32 0, %v1373
    %v1375 = vrot.slane %v1311, %v1374
    %vm1376 = vcmp.lt.s32.totalorder %v1210, %v1315
    %vm1377 = vcmp.lt.s32.totalorder %v1211, %v1315
    %vm1378 = vcmp.lt.s32.totalorder %v1210, %v1319
    %vm1379 = vcmp.lt.s32.totalorder %v1211, %v1319
    %vm1380 = vcmp.lt.s32.totalorder %v1210, %v1323
    %vm1381 = vcmp.lt.s32.totalorder %v1211, %v1323
    %vm1382 = vcmp.lt.s32.totalorder %v1210, %v1327
    %vm1383 = vcmp.lt.s32.totalorder %v1211, %v1327
    %vm1384 = vcmp.lt.s32.totalorder %v1210, %v1331
    %vm1385 = vcmp.lt.s32.totalorder %v1211, %v1331
    %vm1386 = vcmp.lt.s32.totalorder %v1210, %v1335
    %vm1387 = vcmp.lt.s32.totalorder %v1211, %v1335
    %vm1388 = vcmp.lt.s32.totalorder %v1210, %v1339
    %vm1389 = vcmp.lt.s32.totalorder %v1211, %v1339
    %vm1390 = vcmp.lt.s32.totalorder %v1210, %v1343
    %vm1391 = vcmp.lt.s32.totalorder %v1211, %v1343
    %vm1392 = vcmp.lt.s32.totalorder %v1210, %v1347
    %vm1393 = vcmp.lt.s32.totalorder %v1211, %v1347
    %vm1394 = vcmp.lt.s32.totalorder %v1210, %v1351
    %vm1395 = vcmp.lt.s32.totalorder %v1211, %v1351
    %vm1396 = vcmp.lt.s32.totalorder %v1210, %v1355
    %vm1397 = vcmp.lt.s32.totalorder %v1211, %v1355
    %vm1398 = vcmp.lt.s32.totalorder %v1210, %v1359
    %vm1399 = vcmp.lt.s32.totalorder %v1211, %v1359
    %vm1400 = vcmp.lt.s32.totalorder %v1210, %v1363
    %vm1401 = vcmp.lt.s32.totalorder %v1211, %v1363
    %vm1402 = vcmp.lt.s32.totalorder %v1210, %v1367
    %vm1403 = vcmp.lt.s32.totalorder %v1211, %v1367
    %vm1404 = vcmp.lt.s32.totalorder %v1210, %v1371
    %vm1405 = vcmp.lt.s32.totalorder %v1211, %v1371
    %vm1406 = vcmp.lt.s32.totalorder %v1210, %v1375
    %vm1407 = vcmp.lt.s32.totalorder %v1211, %v1375
    %v1408 = vsel %vm1376, 1, 0
    %v1409 = vsel %vm1377, 1, 0
    %v1410 = vsel %vm1378, 1, 0
    %v1411 = vsel %vm1379, 1, 0
    %v1412 = vsel %vm1380, 1, 0
    %v1413 = vsel %vm1381, 1, 0
    %v1414 = vsel %vm1382, 1, 0
    %v1415 = vsel %vm1383, 1, 0
    %v1416 = vsel %vm1384, 1, 0
    %v1417 = vsel %vm1385, 1, 0
    %v1418 = vsel %vm1386, 1, 0
    %v1419 = vsel %vm1387, 1, 0
    %v1420 = vsel %vm1388, 1, 0
    %v1421 = vsel %vm1389, 1, 0
    %v1422 = vsel %vm1390, 1, 0
    %v1423 = vsel %vm1391, 1, 0
    %v1424 = vsel %vm1392, 1, 0
    %v1425 = vsel %vm1393, 1, 0
    %v1426 = vsel %vm1394, 1, 0
    %v1427 = vsel %vm1395, 1, 0
    %v1428 = vsel %vm1396, 1, 0
    %v1429 = vsel %vm1397, 1, 0
    %v1430 = vsel %vm1398, 1, 0
    %v1431 = vsel %vm1399, 1, 0
    %v1432 = vsel %vm1400, 1, 0
    %v1433 = vsel %vm1401, 1, 0
    %v1434 = vsel %vm1402, 1, 0
    %v1435 = vsel %vm1403, 1, 0
    %v1436 = vsel %vm1404, 1, 0
    %v1437 = vsel %vm1405, 1, 0
    %v1438 = vsel %vm1406, 1, 0
    %v1439 = vsel %vm1407, 1, 0
    %1440 = vset.pattern.permute.xlu0 0
    %1441 = vperm.xlu0 %1440, %v1408
    %v1442 = vpop.permute.xlu0 %1441
    %1443 = vset.pattern.permute.xlu0 0
    %1444 = vperm.xlu0 %1443, %v1409
    %v1445 = vpop.permute.xlu0 %1444
    %1446 = vset.pattern.permute.xlu0 0
    %1447 = vperm.xlu0 %1446, %v1410
    %v1448 = vpop.permute.xlu0 %1447
    %1449 = vset.pattern.permute.xlu0 0
    %1450 = vperm.xlu0 %1449, %v1411
    %v1451 = vpop.permute.xlu0 %1450
    %1452 = vset.pattern.permute.xlu0 0
    %1453 = vperm.xlu0 %1452, %v1412
    %v1454 = vpop.permute.xlu0 %1453
    %1455 = vset.pattern.permute.xlu0 0
    %1456 = vperm.xlu0 %1455, %v1413
    %v1457 = vpop.permute.xlu0 %1456
    %1458 = vset.pattern.permute.xlu0 0
    %1459 = vperm.xlu0 %1458, %v1414
    %v1460 = vpop.permute.xlu0 %1459
    %1461 = vset.pattern.permute.xlu0 0
    %1462 = vperm.xlu0 %1461, %v1415
    %v1463 = vpop.permute.xlu0 %1462
    %1464 = vset.pattern.permute.xlu0 0
    %1465 = vperm.xlu0 %1464, %v1416
    %v1466 = vpop.permute.xlu0 %1465
    %1467 = vset.pattern.permute.xlu0 0
    %1468 = vperm.xlu0 %1467, %v1417
    %v1469 = vpop.permute.xlu0 %1468
    %1470 = vset.pattern.permute.xlu0 0
    %1471 = vperm.xlu0 %1470, %v1418
    %v1472 = vpop.permute.xlu0 %1471
    %1473 = vset.pattern.permute.xlu0 0
    %1474 = vperm.xlu0 %1473, %v1419
    %v1475 = vpop.permute.xlu0 %1474
    %1476 = vset.pattern.permute.xlu0 0
    %1477 = vperm.xlu0 %1476, %v1420
    %v1478 = vpop.permute.xlu0 %1477
    %1479 = vset.pattern.permute.xlu0 0
    %1480 = vperm.xlu0 %1479, %v1421
    %v1481 = vpop.permute.xlu0 %1480
    %1482 = vset.pattern.permute.xlu0 0
    %1483 = vperm.xlu0 %1482, %v1422
    %v1484 = vpop.permute.xlu0 %1483
    %1485 = vset.pattern.permute.xlu0 0
    %1486 = vperm.xlu0 %1485, %v1423
    %v1487 = vpop.permute.xlu0 %1486
    %1488 = vset.pattern.permute.xlu0 0
    %1489 = vperm.xlu0 %1488, %v1424
    %v1490 = vpop.permute.xlu0 %1489
    %1491 = vset.pattern.permute.xlu0 0
    %1492 = vperm.xlu0 %1491, %v1425
    %v1493 = vpop.permute.xlu0 %1492
    %1494 = vset.pattern.permute.xlu0 0
    %1495 = vperm.xlu0 %1494, %v1426
    %v1496 = vpop.permute.xlu0 %1495
    %1497 = vset.pattern.permute.xlu0 0
    %1498 = vperm.xlu0 %1497, %v1427
    %v1499 = vpop.permute.xlu0 %1498
    %1500 = vset.pattern.permute.xlu0 0
    %1501 = vperm.xlu0 %1500, %v1428
    %v1502 = vpop.permute.xlu0 %1501
    %1503 = vset.pattern.permute.xlu0 0
    %1504 = vperm.xlu0 %1503, %v1429
    %v1505 = vpop.permute.xlu0 %1504
    %1506 = vset.pattern.permute.xlu0 0
    %1507 = vperm.xlu0 %1506, %v1430
    %v1508 = vpop.permute.xlu0 %1507
    %1509 = vset.pattern.permute.xlu0 0
    %1510 = vperm.xlu0 %1509, %v1431
    %v1511 = vpop.permute.xlu0 %1510
    %1512 = vset.pattern.permute.xlu0 0
    %1513 = vperm.xlu0 %1512, %v1432
    %v1514 = vpop.permute.xlu0 %1513
    %1515 = vset.pattern.permute.xlu0 0
    %1516 = vperm.xlu0 %1515, %v1433
    %v1517 = vpop.permute.xlu0 %1516
    %1518 = vset.pattern.permute.xlu0 0
    %1519 = vperm.xlu0 %1518, %v1434
    %v1520 = vpop.permute.xlu0 %1519
    %1521 = vset.pattern.permute.xlu0 0
    %1522 = vperm.xlu0 %1521, %v1435
    %v1523 = vpop.permute.xlu0 %1522
    %1524 = vset.pattern.permute.xlu0 0
    %1525 = vperm.xlu0 %1524, %v1436
    %v1526 = vpop.permute.xlu0 %1525
    %1527 = vset.pattern.permute.xlu0 0
    %1528 = vperm.xlu0 %1527, %v1437
    %v1529 = vpop.permute.xlu0 %1528
    %1530 = vset.pattern.permute.xlu0 0
    %1531 = vperm.xlu0 %1530, %v1438
    %v1532 = vpop.permute.xlu0 %1531
    %1533 = vset.pattern.permute.xlu0 0
    %1534 = vperm.xlu0 %1533, %v1439
    %v1535 = vpop.permute.xlu0 %1534
    %vm1536 = vcmp.eq.s32.totalorder %v1442, 1
    %vm1537 = vcmp.eq.s32.totalorder %v1445, 1
    %vm1538 = vcmp.eq.s32.totalorder %v1448, 1
    %vm1539 = vcmp.eq.s32.totalorder %v1451, 1
    %vm1540 = vcmp.eq.s32.totalorder %v1454, 1
    %vm1541 = vcmp.eq.s32.totalorder %v1457, 1
    %vm1542 = vcmp.eq.s32.totalorder %v1460, 1
    %vm1543 = vcmp.eq.s32.totalorder %v1463, 1
    %vm1544 = vcmp.eq.s32.totalorder %v1466, 1
    %vm1545 = vcmp.eq.s32.totalorder %v1469, 1
    %vm1546 = vcmp.eq.s32.totalorder %v1472, 1
    %vm1547 = vcmp.eq.s32.totalorder %v1475, 1
    %vm1548 = vcmp.eq.s32.totalorder %v1478, 1
    %vm1549 = vcmp.eq.s32.totalorder %v1481, 1
    %vm1550 = vcmp.eq.s32.totalorder %v1484, 1
    %vm1551 = vcmp.eq.s32.totalorder %v1487, 1
    %vm1552 = vcmp.eq.s32.totalorder %v1490, 1
    %vm1553 = vcmp.eq.s32.totalorder %v1493, 1
    %vm1554 = vcmp.eq.s32.totalorder %v1496, 1
    %vm1555 = vcmp.eq.s32.totalorder %v1499, 1
    %vm1556 = vcmp.eq.s32.totalorder %v1502, 1
    %vm1557 = vcmp.eq.s32.totalorder %v1505, 1
    %vm1558 = vcmp.eq.s32.totalorder %v1508, 1
    %vm1559 = vcmp.eq.s32.totalorder %v1511, 1
    %vm1560 = vcmp.eq.s32.totalorder %v1514, 1
    %vm1561 = vcmp.eq.s32.totalorder %v1517, 1
    %vm1562 = vcmp.eq.s32.totalorder %v1520, 1
    %vm1563 = vcmp.eq.s32.totalorder %v1523, 1
    %vm1564 = vcmp.eq.s32.totalorder %v1526, 1
    %vm1565 = vcmp.eq.s32.totalorder %v1529, 1
    %vm1566 = vcmp.eq.s32.totalorder %v1532, 1
    %vm1567 = vcmp.eq.s32.totalorder %v1535, 1
    %v1568 = vsel %vm1536, %v1177, -1e+30
    %v1569 = vsel %vm1537, %v1178, -1e+30
    %v1570 = vsel %vm1538, %v1179, -1e+30
    %v1571 = vsel %vm1539, %v1180, -1e+30
    %v1572 = vsel %vm1540, %v1181, -1e+30
    %v1573 = vsel %vm1541, %v1182, -1e+30
    %v1574 = vsel %vm1542, %v1183, -1e+30
    %v1575 = vsel %vm1543, %v1184, -1e+30
    %v1576 = vsel %vm1544, %v1185, -1e+30
    %v1577 = vsel %vm1545, %v1186, -1e+30
    %v1578 = vsel %vm1546, %v1187, -1e+30
    %v1579 = vsel %vm1547, %v1188, -1e+30
    %v1580 = vsel %vm1548, %v1189, -1e+30
    %v1581 = vsel %vm1549, %v1190, -1e+30
    %v1582 = vsel %vm1550, %v1191, -1e+30
    %v1583 = vsel %vm1551, %v1192, -1e+30
    %v1584 = vsel %vm1552, %v1193, -1e+30
    %v1585 = vsel %vm1553, %v1194, -1e+30
    %v1586 = vsel %vm1554, %v1195, -1e+30
    %v1587 = vsel %vm1555, %v1196, -1e+30
    %v1588 = vsel %vm1556, %v1197, -1e+30
    %v1589 = vsel %vm1557, %v1198, -1e+30
    %v1590 = vsel %vm1558, %v1199, -1e+30
    %v1591 = vsel %vm1559, %v1200, -1e+30
    %v1592 = vsel %vm1560, %v1201, -1e+30
    %v1593 = vsel %vm1561, %v1202, -1e+30
    %v1594 = vsel %vm1562, %v1203, -1e+30
    %v1595 = vsel %vm1563, %v1204, -1e+30
    %v1596 = vsel %vm1564, %v1205, -1e+30
    %v1597 = vsel %vm1565, %v1206, -1e+30
    %v1598 = vsel %vm1566, %v1207, -1e+30
    %v1599 = vsel %vm1567, %v1208, -1e+30
    %v1600 = vmax.f32 %v1568, %v1569
    %v1601 = vrot.slane %v1600, 4
    %v1602 = vmax.f32 %v1600, %v1601
    %v1603 = vrot.slane %v1602, 2
    %v1604 = vmax.f32 %v1602, %v1603
    %v1605 = vrot.slane %v1604, 1
    %v1606 = vmax.f32 %v1604, %v1605
    %v1607 = vmax.f32 %v1570, %v1571
    %v1608 = vrot.slane %v1607, 4
    %v1609 = vmax.f32 %v1607, %v1608
    %v1610 = vrot.slane %v1609, 2
    %v1611 = vmax.f32 %v1609, %v1610
    %v1612 = vrot.slane %v1611, 1
    %v1613 = vmax.f32 %v1611, %v1612
    %v1614 = vmax.f32 %v1572, %v1573
    %v1615 = vrot.slane %v1614, 4
    %v1616 = vmax.f32 %v1614, %v1615
    %v1617 = vrot.slane %v1616, 2
    %v1618 = vmax.f32 %v1616, %v1617
    %v1619 = vrot.slane %v1618, 1
    %v1620 = vmax.f32 %v1618, %v1619
    %v1621 = vmax.f32 %v1574, %v1575
    %v1622 = vrot.slane %v1621, 4
    %v1623 = vmax.f32 %v1621, %v1622
    %v1624 = vrot.slane %v1623, 2
    %v1625 = vmax.f32 %v1623, %v1624
    %v1626 = vrot.slane %v1625, 1
    %v1627 = vmax.f32 %v1625, %v1626
    %v1628 = vmax.f32 %v1576, %v1577
    %v1629 = vrot.slane %v1628, 4
    %v1630 = vmax.f32 %v1628, %v1629
    %v1631 = vrot.slane %v1630, 2
    %v1632 = vmax.f32 %v1630, %v1631
    %v1633 = vrot.slane %v1632, 1
    %v1634 = vmax.f32 %v1632, %v1633
    %v1635 = vmax.f32 %v1578, %v1579
    %v1636 = vrot.slane %v1635, 4
    %v1637 = vmax.f32 %v1635, %v1636
    %v1638 = vrot.slane %v1637, 2
    %v1639 = vmax.f32 %v1637, %v1638
    %v1640 = vrot.slane %v1639, 1
    %v1641 = vmax.f32 %v1639, %v1640
    %v1642 = vmax.f32 %v1580, %v1581
    %v1643 = vrot.slane %v1642, 4
    %v1644 = vmax.f32 %v1642, %v1643
    %v1645 = vrot.slane %v1644, 2
    %v1646 = vmax.f32 %v1644, %v1645
    %v1647 = vrot.slane %v1646, 1
    %v1648 = vmax.f32 %v1646, %v1647
    %v1649 = vmax.f32 %v1582, %v1583
    %v1650 = vrot.slane %v1649, 4
    %v1651 = vmax.f32 %v1649, %v1650
    %v1652 = vrot.slane %v1651, 2
    %v1653 = vmax.f32 %v1651, %v1652
    %v1654 = vrot.slane %v1653, 1
    %v1655 = vmax.f32 %v1653, %v1654
    %v1656 = vmax.f32 %v1584, %v1585
    %v1657 = vrot.slane %v1656, 4
    %v1658 = vmax.f32 %v1656, %v1657
    %v1659 = vrot.slane %v1658, 2
    %v1660 = vmax.f32 %v1658, %v1659
    %v1661 = vrot.slane %v1660, 1
    %v1662 = vmax.f32 %v1660, %v1661
    %v1663 = vmax.f32 %v1586, %v1587
    %v1664 = vrot.slane %v1663, 4
    %v1665 = vmax.f32 %v1663, %v1664
    %v1666 = vrot.slane %v1665, 2
    %v1667 = vmax.f32 %v1665, %v1666
    %v1668 = vrot.slane %v1667, 1
    %v1669 = vmax.f32 %v1667, %v1668
    %v1670 = vmax.f32 %v1588, %v1589
    %v1671 = vrot.slane %v1670, 4
    %v1672 = vmax.f32 %v1670, %v1671
    %v1673 = vrot.slane %v1672, 2
    %v1674 = vmax.f32 %v1672, %v1673
    %v1675 = vrot.slane %v1674, 1
    %v1676 = vmax.f32 %v1674, %v1675
    %v1677 = vmax.f32 %v1590, %v1591
    %v1678 = vrot.slane %v1677, 4
    %v1679 = vmax.f32 %v1677, %v1678
    %v1680 = vrot.slane %v1679, 2
    %v1681 = vmax.f32 %v1679, %v1680
    %v1682 = vrot.slane %v1681, 1
    %v1683 = vmax.f32 %v1681, %v1682
    %v1684 = vmax.f32 %v1592, %v1593
    %v1685 = vrot.slane %v1684, 4
    %v1686 = vmax.f32 %v1684, %v1685
    %v1687 = vrot.slane %v1686, 2
    %v1688 = vmax.f32 %v1686, %v1687
    %v1689 = vrot.slane %v1688, 1
    %v1690 = vmax.f32 %v1688, %v1689
    %v1691 = vmax.f32 %v1594, %v1595
    %v1692 = vrot.slane %v1691, 4
    %v1693 = vmax.f32 %v1691, %v1692
    %v1694 = vrot.slane %v1693, 2
    %v1695 = vmax.f32 %v1693, %v1694
    %v1696 = vrot.slane %v1695, 1
    %v1697 = vmax.f32 %v1695, %v1696
    %v1698 = vmax.f32 %v1596, %v1597
    %v1699 = vrot.slane %v1698, 4
    %v1700 = vmax.f32 %v1698, %v1699
    %v1701 = vrot.slane %v1700, 2
    %v1702 = vmax.f32 %v1700, %v1701
    %v1703 = vrot.slane %v1702, 1
    %v1704 = vmax.f32 %v1702, %v1703
    %v1705 = vmax.f32 %v1598, %v1599
    %v1706 = vrot.slane %v1705, 4
    %v1707 = vmax.f32 %v1705, %v1706
    %v1708 = vrot.slane %v1707, 2
    %v1709 = vmax.f32 %v1707, %v1708
    %v1710 = vrot.slane %v1709, 1
    %v1711 = vmax.f32 %v1709, %v1710
    %v1712 = vpack.c.bf16 %v1606, %v1606
    %v1713 = vpack.c.bf16 %v1613, %v1613
    %v1714 = vpack.c.bf16 %v1620, %v1620
    %v1715 = vpack.c.bf16 %v1627, %v1627
    %v1716 = vpack.c.bf16 %v1634, %v1634
    %v1717 = vpack.c.bf16 %v1641, %v1641
    %v1718 = vpack.c.bf16 %v1648, %v1648
    %v1719 = vpack.c.bf16 %v1655, %v1655
    %v1720 = vpack.c.bf16 %v1662, %v1662
    %v1721 = vpack.c.bf16 %v1669, %v1669
    %v1722 = vpack.c.bf16 %v1676, %v1676
    %v1723 = vpack.c.bf16 %v1683, %v1683
    %v1724 = vpack.c.bf16 %v1690, %v1690
    %v1725 = vpack.c.bf16 %v1697, %v1697
    %v1726 = vpack.c.bf16 %v1704, %v1704
    %v1727 = vpack.c.bf16 %v1711, %v1711
    %v1728 = vld [vmem:[#allocation7] sm:$0xf]
    %v1729 = vld [vmem:[#allocation7 + $0x4] sm:$0xf]
    %v1730 = vld [vmem:[#allocation7 + $0x8] sm:$0xf]
    %v1731 = vld [vmem:[#allocation7 + $0xc] sm:$0xf]
    %v1732 = vld [vmem:[#allocation7 + $0x10] sm:$0xf]
    %v1733 = vld [vmem:[#allocation7 + $0x14] sm:$0xf]
    %v1734 = vld [vmem:[#allocation7 + $0x18] sm:$0xf]
    %v1735 = vld [vmem:[#allocation7 + $0x1c] sm:$0xf]
    %v1736 = vld [vmem:[#allocation7 + $0x20] sm:$0xf]
    %v1737 = vld [vmem:[#allocation7 + $0x24] sm:$0xf]
    %v1738 = vld [vmem:[#allocation7 + $0x28] sm:$0xf]
    %v1739 = vld [vmem:[#allocation7 + $0x2c] sm:$0xf]
    %v1740 = vld [vmem:[#allocation7 + $0x30] sm:$0xf]
    %v1741 = vld [vmem:[#allocation7 + $0x34] sm:$0xf]
    %v1742 = vld [vmem:[#allocation7 + $0x38] sm:$0xf]
    %v1743 = vld [vmem:[#allocation7 + $0x3c] sm:$0xf]
    %v1744 = vld [vmem:[%s4] sm:$0x1]
    %v1746 = vlaneseq
    %v1747 = vshrl.u32 %v1746, 7
    %v1748 = vsub.s32 0, %v1747
    %v1749 = vrot.slane %v1744, %v1748
    %v1767 = vunpack.c.l.b16 %v1712
    %v1768 = vunpack.c.l.b16 %v1713
    %v1769 = vunpack.c.l.b16 %v1714
    %v1770 = vunpack.c.l.b16 %v1715
    %v1771 = vunpack.c.l.b16 %v1716
    %v1772 = vunpack.c.l.b16 %v1717
    %v1773 = vunpack.c.l.b16 %v1718
    %v1774 = vunpack.c.l.b16 %v1719
    %v1775 = vunpack.c.l.b16 %v1720
    %v1776 = vunpack.c.l.b16 %v1721
    %v1777 = vunpack.c.l.b16 %v1722
    %v1778 = vunpack.c.l.b16 %v1723
    %v1779 = vunpack.c.l.b16 %v1724
    %v1780 = vunpack.c.l.b16 %v1725
    %v1781 = vunpack.c.l.b16 %v1726
    %v1782 = vunpack.c.l.b16 %v1727
    %vm1783 = vcmask 1041409
    %v1784 = vsel %vm1783, %v1768, %v1767
    %vm1785 = vcmask 1042434
    %v1786 = vsel %vm1785, %v1769, %v1784
    %vm1787 = vcmask 1043459
    %v1788 = vsel %vm1787, %v1770, %v1786
    %vm1789 = vcmask 1044484
    %v1790 = vsel %vm1789, %v1771, %v1788
    %vm1791 = vcmask 1045509
    %v1792 = vsel %vm1791, %v1772, %v1790
    %vm1793 = vcmask 1046534
    %v1794 = vsel %vm1793, %v1773, %v1792
    %vm1795 = vcmask 1047559
    %v1796 = vsel %vm1795, %v1774, %v1794
    %v1797 = vsel %vm1783, %v1776, %v1775
    %v1798 = vsel %vm1785, %v1777, %v1797
    %v1799 = vsel %vm1787, %v1778, %v1798
    %v1800 = vsel %vm1789, %v1779, %v1799
    %v1801 = vsel %vm1791, %v1780, %v1800
    %v1802 = vsel %vm1793, %v1781, %v1801
    %v1803 = vsel %vm1795, %v1782, %v1802
    %v1804 = vpack.c.b16 %v1803, %v1796
    %v1822 = vunpack.c.l.b16 %v1728
    %v1823 = vunpack.c.l.b16 %v1729
    %v1824 = vunpack.c.l.b16 %v1730
    %v1825 = vunpack.c.l.b16 %v1731
    %v1826 = vunpack.c.l.b16 %v1732
    %v1827 = vunpack.c.l.b16 %v1733
    %v1828 = vunpack.c.l.b16 %v1734
    %v1829 = vunpack.c.l.b16 %v1735
    %v1830 = vunpack.c.l.b16 %v1736
    %v1831 = vunpack.c.l.b16 %v1737
    %v1832 = vunpack.c.l.b16 %v1738
    %v1833 = vunpack.c.l.b16 %v1739
    %v1834 = vunpack.c.l.b16 %v1740
    %v1835 = vunpack.c.l.b16 %v1741
    %v1836 = vunpack.c.l.b16 %v1742
    %v1837 = vunpack.c.l.b16 %v1743
    %v1838 = vpack.c.b16 %v1823, %v1822
    %v1839 = vpack.c.b16 %v1825, %v1824
    %v1840 = vpack.c.b16 %v1827, %v1826
    %v1841 = vpack.c.b16 %v1829, %v1828
    %v1842 = vpack.c.b16 %v1831, %v1830
    %v1843 = vpack.c.b16 %v1833, %v1832
    %v1844 = vpack.c.b16 %v1835, %v1834
    %v1845 = vpack.c.b16 %v1837, %v1836
    %1854 = vmatprep.subr.bf16.mxu0 0
    %1855 = vmatpush1.bf16.msra.mxu0 %v1838
    %1856 = vmatprep.subr.bf16.mxu0 0
    %1857 = vmatpush1.bf16.msra.mxu0 %v1839
    %1858 = vmatprep.subr.bf16.mxu0 0
    %1859 = vmatpush1.bf16.msra.mxu0 %v1840
    %1860 = vmatprep.subr.bf16.mxu0 0
    %1861 = vmatpush1.bf16.msra.mxu0 %v1841
    %1862 = vmatprep.subr.bf16.mxu0 0
    %1863 = vmatpush1.bf16.msra.mxu0 %v1842
    %1864 = vmatprep.subr.bf16.mxu0 0
    %1865 = vmatpush1.bf16.msra.mxu0 %v1843
    %1866 = vmatprep.subr.bf16.mxu0 0
    %1867 = vmatpush1.bf16.msra.mxu0 %v1844
    %1868 = vmatprep.subr.bf16.mxu0 0
    %1869 = vmatpush1.bf16.msra.mxu0 %v1845
    %1870 = vmatprep.subr.bf16.mxu0 0
    %1871 = vmatpush1.bf16.msra.mxu0 0
    %1872 = vmatprep.subr.bf16.mxu0 0
    %1873 = vmatpush1.bf16.msra.mxu0 0
    %1874 = vmatprep.subr.bf16.mxu0 0
    %1875 = vmatpush1.bf16.msra.mxu0 0
    %1876 = vmatprep.subr.bf16.mxu0 0
    %1877 = vmatpush1.bf16.msra.mxu0 0
    %1878 = vmatprep.subr.bf16.mxu0 0
    %1879 = vmatpush1.bf16.msra.mxu0 0
    %1880 = vmatprep.subr.bf16.mxu0 0
    %1881 = vmatpush1.bf16.msra.mxu0 0
    %1882 = vmatprep.subr.bf16.mxu0 0
    %1883 = vmatpush1.bf16.msra.mxu0 0
    %1884 = vmatprep.subr.bf16.mxu0 0
    %1885 = vmatpush1.bf16.msra.mxu0 0
    %1886 = vmatprep.mubr.bf16.mxu0 0
    %1887 = vmatmul.mubr.bf16.gmra.mrb[0].mxu0 %v1804
    %v1888 = vpop.f32.mrb[0].mxu0
    %v1889 = vadd.f32 %v1749, %v1888
    %v1890 = vpop.f32.mrb[0].mxu0
    %v1891 = vpop.f32.mrb[0].mxu0
    %v1892 = vadd.f32 %v1749, %v1891
    %v1893 = vpop.f32.mrb[0].mxu0
    %1894 = vdwg.mxu0
    %1895 = vst [vmem:[#allocation8] sm:$0xff] %v1889
    %1896 = vst [vmem:[#allocation8 + $0x8] sm:$0xff] %v1892
    // Predicated region
    $region34: #{tpu_custom_call.1} parent=1 // pred_check
      _
    $region35: #{tpu_custom_call.1} parent=1 // pred_check_branch
      %1898 = sbr.rel (0) target = $region37
    $region36: #{tpu_custom_call.1} parent=1 // pred_region
      %s1900 = ssub.s32 256, 256
      %1901 = vsyncadd [#allocation4], %s1900
      %s1902 = sshll.u32 [#allocation8], 4
      %s1903 = int_to_ptr.vmem [resolvable:$true] %s1902
      %1908 = dma.vmem_to_hbm [thread:$0]  %s1903, 256, %s5, [#allocation4], 128, 128, 8
    $region37: #{tpu_custom_call.1} parent=1 // pred_fallthru
      _
    // Predicated region
    $region38: #{tpu_custom_call.1} parent=1 // pred_check
      _
    $region39: #{tpu_custom_call.1} parent=1 // pred_check_branch
      %1910 = sbr.rel (0) target = $region41
    $region40: #{tpu_custom_call.1} parent=1 // pred_region
      %1911 = dma.done [#allocation4], 256
    $region41: #{tpu_custom_call.1} parent=1 // pred_fallthru
      _
    %1912 = vsyncpa [#allocation3], 1
    %1913 = vsyncpa [#allocation6], 1
    %1914 = vsyncpa [#allocation4], 1

</llo_original>
